<compile_context>
chip_gen: v6e
topology: v6e:2x2x1
jax: 0.10.0
libtpu: 0.0.40
codegen_flags: <defaults>
</compile_context>

<pallas_src>
import jax
import jax.numpy as jnp
import numpy as np
from jax import lax
from jax.experimental import pallas as pl
from jax.experimental.pallas import tpu as pltpu

B, D, H = 8, 16, 32            # batch, feature dim, hidden dim of the residual net
N_POWER_SERIES = 8             # fixed number of power-series terms
FP_UNROLL = 4                  # net() evaluations per convergence check
MAX_FP_CHECKS = 250            # 250 * 4 = 1000 iterations, matching the module's cap
ATOL, RTOL = 1e-5, 1e-5


# --------------------------------------------------------------- fused kernel
def _residual_kernel(z_ref, v_ref, w1_ref, b1_ref, w2_ref, b2_ref,
                     w1t_ref, w2t_ref, x_ref, ld_ref):
    """Fixed-point inverse x = z - net(x), then truncated power-series logdet.

    Everything stays resident in VMEM: weights are loaded once, the while-loop
    carries x/x_prev as values, h never leaves the kernel.
    """
    z = z_ref[...]
    v = v_ref[...]
    w1 = w1_ref[...]                                   # (D, H)
    w2 = w2_ref[...]                                   # (H, D)
    w1t = w1t_ref[...]                                 # (H, D) == W1^T
    w2t = w2t_ref[...]                                 # (D, H) == W2^T

    # Hoisted out of the loop: bias broadcast, b2 folded into the update target,
    # and the convergence tolerance (the module computes tol from the input y==z).
    b1b = jnp.broadcast_to(b1_ref[...], (B, H))
    zb = z - b2_ref[...]                               # z - b2, so step() skips the add
    tol = ATOL + jnp.abs(z) * RTOL

    def step(x):
        h = jnp.tanh(jnp.dot(x, w1, preferred_element_type=jnp.float32) + b1b)
        return zb - jnp.dot(h, w2, preferred_element_type=jnp.float32)

    # --- iResBlock._reverse_fixed_point: x = z - net(x) ----------------------
    x0 = step(z)                                       # z - net(z)

    def cond(state):
        x, x_prev, i = state
        diff = x - x_prev
        return jnp.logical_and(jnp.any(diff * diff >= tol), i < MAX_FP_CHECKS)

    def body(state):
        x, x_prev, i = state
        # FP_UNROLL dependent steps per convergence check (amortizes the
        # cross-lane reduce + scalar branch; extra steps only contract further).
        for _ in range(FP_UNROLL):
            x, x_prev = step(x), x
        return x, x_prev, i + 1

    x, _, _ = lax.while_loop(cond, body, (x0, z, jnp.int32(0)))

    # --- iResBlock._logdetgrad at the fixed point -----------------------------
    h = jnp.tanh(jnp.dot(x, w1, preferred_element_type=jnp.float32) + b1b)
    d = 1.0 - h * h                                    # tanh'(pre-activation), (B, H)

    # vjp  w <- ((w @ W2^T) * d) @ W1^T, fully unrolled, coefficients as Python
    # consts, pre-transposed weights so every matmul is a plain NN dot.
    w = v
    acc = jnp.zeros((B, D), jnp.float32)
    for k in range(1, N_POWER_SERIES + 1):
        t = jnp.dot(w, w2t, preferred_element_type=jnp.float32) * d    # (B, H)
        w = jnp.dot(t, w1t, preferred_element_type=jnp.float32)        # (B, D)
        acc = acc + (((-1.0) ** (k + 1)) / float(k)) * w

    x_ref[...] = x
    ld_ref[...] = jnp.sum(acc * v, axis=1, keepdims=True)              # (B, 1)


# ------------------------------------------------------------------- wrapper
def residual_forward(z, vareps, params):
    """Residual.forward(z) with backwards=True -> (x, -log_det)."""
    w1, b1, w2, b2 = params["W1"], params["b1"], params["W2"], params["b2"]
    vmem = pl.BlockSpec(memory_space=pltpu.MemorySpace.VMEM)
    x, logdetgrad = pl.pallas_call(
        _residual_kernel,
        out_shape=(jax.ShapeDtypeStruct((B, D), jnp.float32),
                   jax.ShapeDtypeStruct((B, 1), jnp.float32)),
        in_specs=[vmem] * 8,
        out_specs=(vmem, vmem),
    )(z, vareps, w1, b1, w2, b2, w1.T, w2.T)
    # log_det = logpy + logdetgrad with logpy = 0; Residual returns (x, -log_det).
    return x, -logdetgrad.reshape(-1)


# ------------------------------------------------------------------ reference
def reference_forward(z, vareps, params):
    def net(x):
        return jnp.tanh(x @ params["W1"] + params["b1"]) @ params["W2"] + params["b2"]

    tol = ATOL + jnp.abs(z) * RTOL
    x, x_prev = z - net(z), z
    for _ in range(200):
        if bool(jnp.all((x - x_prev) ** 2 < tol)):
            break
        x, x_prev = z - net(x), x

    g, vjp_fn = jax.vjp(net, x)
    w = vareps
    acc = jnp.zeros((z.shape[0],), jnp.float32)
    for k in range(1, N_POWER_SERIES + 1):
        (w,) = vjp_fn(w)
        acc = acc + ((-1.0) ** (k + 1) / k) * jnp.sum(w * vareps, axis=1)
    return x, -acc


# ----------------------------------------------------------------------- main
if __name__ == "__main__":
    key = jax.random.PRNGKey(0)
    k1, k2, k3, k4, k5, k6 = jax.random.split(key, 6)

    # Deterministic Lipschitz-constrained MLP (spectral norm 0.7 per layer -> L < 0.5,
    # so the fixed-point iteration contracts by <=0.49 per step and converges in ~10).
    W1 = jax.random.normal(k1, (D, H), jnp.float32)
    W1 = W1 * (0.7 / np.linalg.norm(np.asarray(W1), 2))
    W2 = jax.random.normal(k2, (H, D), jnp.float32)
    W2 = W2 * (0.7 / np.linalg.norm(np.asarray(W2), 2))
    b1 = 0.01 * jax.random.normal(k3, (1, H), jnp.float32)
    b2 = 0.01 * jax.random.normal(k4, (1, D), jnp.float32)
    params = {"W1": W1, "b1": b1, "W2": W2, "b2": b2}

    z = jax.random.normal(k5, (B, D), jnp.float32)
    # PyTorch draws torch.randn_like(x) per call; here a deterministic probe.
    vareps = jax.random.normal(k6, (B, D), jnp.float32)

    z_out, neg_log_det = jax.block_until_ready(
        jax.jit(residual_forward)(z, vareps, params))

    z_ref, neg_log_det_ref = reference_forward(z, vareps, params)

    assert z_out.shape == (B, D) and neg_log_det.shape == (B,)
    assert np.all(np.isfinite(np.asarray(z_out)))
    assert np.allclose(np.asarray(z_out), np.asarray(z_ref), atol=1e-2, rtol=1e-2)
    assert np.allclose(np.asarray(neg_log_det), np.asarray(neg_log_det_ref),
                       atol=1e-2, rtol=1e-2)

    print("KERNEL_OK")
</pallas_src>

<mosaic_0001>
module attributes {stable_mosaic.version = 11 : i64} {
  func.func @_residual_kernel(%arg0: memref<8x16xf32, #tpu.memory_space<vmem>>, %arg1: memref<8x16xf32, #tpu.memory_space<vmem>>, %arg2: memref<16x32xf32, #tpu.memory_space<vmem>>, %arg3: memref<1x32xf32, #tpu.memory_space<vmem>>, %arg4: memref<32x16xf32, #tpu.memory_space<vmem>>, %arg5: memref<1x16xf32, #tpu.memory_space<vmem>>, %arg6: memref<32x16xf32, #tpu.memory_space<vmem>>, %arg7: memref<16x32xf32, #tpu.memory_space<vmem>>, %arg8: memref<8x16xf32, #tpu.memory_space<vmem>>, %arg9: memref<8x1xf32, #tpu.memory_space<vmem>>) attributes {dimension_semantics = [], scalar_prefetch = 0 : i64, scratch_operands = 0 : i64, tpu.core_type = #tpu.core_type<tc>} {
    %c0 = arith.constant 0 : index
    %c0_0 = arith.constant 0 : index
    %0 = vector.load %arg0[%c0, %c0_0] : memref<8x16xf32, #tpu.memory_space<vmem>>, vector<8x16xf32>
    %c0_1 = arith.constant 0 : index
    %c0_2 = arith.constant 0 : index
    %1 = vector.load %arg1[%c0_1, %c0_2] : memref<8x16xf32, #tpu.memory_space<vmem>>, vector<8x16xf32>
    %c0_3 = arith.constant 0 : index
    %c0_4 = arith.constant 0 : index
    %2 = vector.load %arg2[%c0_3, %c0_4] : memref<16x32xf32, #tpu.memory_space<vmem>>, vector<16x32xf32>
    %c0_5 = arith.constant 0 : index
    %c0_6 = arith.constant 0 : index
    %3 = vector.load %arg4[%c0_5, %c0_6] : memref<32x16xf32, #tpu.memory_space<vmem>>, vector<32x16xf32>
    %c0_7 = arith.constant 0 : index
    %c0_8 = arith.constant 0 : index
    %4 = vector.load %arg6[%c0_7, %c0_8] : memref<32x16xf32, #tpu.memory_space<vmem>>, vector<32x16xf32>
    %c0_9 = arith.constant 0 : index
    %c0_10 = arith.constant 0 : index
    %5 = vector.load %arg7[%c0_9, %c0_10] : memref<16x32xf32, #tpu.memory_space<vmem>>, vector<16x32xf32>
    %c0_11 = arith.constant 0 : index
    %c0_12 = arith.constant 0 : index
    %6 = vector.load %arg3[%c0_11, %c0_12] : memref<1x32xf32, #tpu.memory_space<vmem>>, vector<1x32xf32>
    %7 = vector.shape_cast %6 : vector<1x32xf32> to vector<1x32xf32>
    %8 = vector.broadcast %7 : vector<1x32xf32> to vector<8x32xf32>
    %c0_13 = arith.constant 0 : index
    %c0_14 = arith.constant 0 : index
    %9 = vector.load %arg5[%c0_13, %c0_14] : memref<1x16xf32, #tpu.memory_space<vmem>>, vector<1x16xf32>
    %10 = vector.broadcast %9 : vector<1x16xf32> to vector<8x16xf32>
    %11 = arith.subf %0, %10 : vector<8x16xf32>
    %12 = math.absf %0 : vector<8x16xf32>
    %cst = arith.constant 9.99999974E-6 : f32
    %13 = vector.broadcast %cst : f32 to vector<8x16xf32>
    %14 = arith.mulf %12, %13 : vector<8x16xf32>
    %cst_15 = arith.constant 9.99999974E-6 : f32
    %15 = vector.broadcast %cst_15 : f32 to vector<8x16xf32>
    %16 = arith.addf %15, %14 : vector<8x16xf32>
    %cst_16 = arith.constant dense<0.000000e+00> : vector<8x32xf32>
    %17 = tpu.matmul %0, %2, %cst_16 {dimension_numbers = #tpu.dot_dimension_numbers<[1], [0], [0], [1], [0, 0, 1, 1], [], []>} : vector<8x16xf32>, vector<16x32xf32>, vector<8x32xf32> -> vector<8x32xf32>
    %18 = arith.addf %17, %8 : vector<8x32xf32>
    %19 = math.tanh %18 : vector<8x32xf32>
    %cst_17 = arith.constant dense<0.000000e+00> : vector<8x16xf32>
    %20 = tpu.matmul %19, %3, %cst_17 {dimension_numbers = #tpu.dot_dimension_numbers<[1], [0], [0], [1], [0, 0, 1, 1], [], []>} : vector<8x32xf32>, vector<32x16xf32>, vector<8x16xf32> -> vector<8x16xf32>
    %21 = arith.subf %11, %20 : vector<8x16xf32>
    %c0_i32 = arith.constant 0 : i32
    %22:3 = scf.while (%arg10 = %21, %arg11 = %0, %arg12 = %c0_i32) : (vector<8x16xf32>, vector<8x16xf32>, i32) -> (vector<8x16xf32>, vector<8x16xf32>, i32) {
      %83 = arith.subf %arg10, %arg11 : vector<8x16xf32>
      %84 = arith.mulf %83, %83 : vector<8x16xf32>
      %85 = arith.cmpf oge, %84, %16 : vector<8x16xf32>
      %cst_50 = arith.constant 1.000000e+00 : f32
      %cst_51 = arith.constant 0.000000e+00 : f32
      %86 = vector.broadcast %cst_50 : f32 to vector<8x16xf32>
      %87 = vector.broadcast %cst_51 : f32 to vector<8x16xf32>
      %88 = arith.select %85, %86, %87 : vector<8x16xi1>, vector<8x16xf32>
      %89 = vector.shape_cast %88 : vector<8x16xf32> to vector<1x8x16xf32>
      %cst_52 = arith.constant dense<0xFF800000> : vector<1xf32>
      %90 = vector.multi_reduction <maximumf>, %89, %cst_52 [1, 2] : vector<1x8x16xf32> to vector<1xf32>
      %91 = vector.shape_cast %90 : vector<1xf32> to vector<1x1x1xf32>
      %92 = vector.extract %91[0, 0, 0] : f32 from vector<1x1x1xf32>
      %cst_53 = arith.constant 0.000000e+00 : f32
      %93 = arith.cmpf ogt, %92, %cst_53 : f32
      %c250_i32 = arith.constant 250 : i32
      %94 = arith.cmpi slt, %arg12, %c250_i32 : i32
      %95 = arith.andi %93, %94 : i1
      scf.condition(%95) %arg10, %arg11, %arg12 : vector<8x16xf32>, vector<8x16xf32>, i32
    } do {
    ^bb0(%arg10: vector<8x16xf32>, %arg11: vector<8x16xf32>, %arg12: i32):
      %cst_50 = arith.constant dense<0.000000e+00> : vector<8x32xf32>
      %83 = tpu.matmul %arg10, %2, %cst_50 {dimension_numbers = #tpu.dot_dimension_numbers<[1], [0], [0], [1], [0, 0, 1, 1], [], []>} : vector<8x16xf32>, vector<16x32xf32>, vector<8x32xf32> -> vector<8x32xf32>
      %84 = arith.addf %83, %8 : vector<8x32xf32>
      %85 = math.tanh %84 : vector<8x32xf32>
      %cst_51 = arith.constant dense<0.000000e+00> : vector<8x16xf32>
      %86 = tpu.matmul %85, %3, %cst_51 {dimension_numbers = #tpu.dot_dimension_numbers<[1], [0], [0], [1], [0, 0, 1, 1], [], []>} : vector<8x32xf32>, vector<32x16xf32>, vector<8x16xf32> -> vector<8x16xf32>
      %87 = arith.subf %11, %86 : vector<8x16xf32>
      %cst_52 = arith.constant dense<0.000000e+00> : vector<8x32xf32>
      %88 = tpu.matmul %87, %2, %cst_52 {dimension_numbers = #tpu.dot_dimension_numbers<[1], [0], [0], [1], [0, 0, 1, 1], [], []>} : vector<8x16xf32>, vector<16x32xf32>, vector<8x32xf32> -> vector<8x32xf32>
      %89 = arith.addf %88, %8 : vector<8x32xf32>
      %90 = math.tanh %89 : vector<8x32xf32>
      %cst_53 = arith.constant dense<0.000000e+00> : vector<8x16xf32>
      %91 = tpu.matmul %90, %3, %cst_53 {dimension_numbers = #tpu.dot_dimension_numbers<[1], [0], [0], [1], [0, 0, 1, 1], [], []>} : vector<8x32xf32>, vector<32x16xf32>, vector<8x16xf32> -> vector<8x16xf32>
      %92 = arith.subf %11, %91 : vector<8x16xf32>
      %cst_54 = arith.constant dense<0.000000e+00> : vector<8x32xf32>
      %93 = tpu.matmul %92, %2, %cst_54 {dimension_numbers = #tpu.dot_dimension_numbers<[1], [0], [0], [1], [0, 0, 1, 1], [], []>} : vector<8x16xf32>, vector<16x32xf32>, vector<8x32xf32> -> vector<8x32xf32>
      %94 = arith.addf %93, %8 : vector<8x32xf32>
      %95 = math.tanh %94 : vector<8x32xf32>
      %cst_55 = arith.constant dense<0.000000e+00> : vector<8x16xf32>
      %96 = tpu.matmul %95, %3, %cst_55 {dimension_numbers = #tpu.dot_dimension_numbers<[1], [0], [0], [1], [0, 0, 1, 1], [], []>} : vector<8x32xf32>, vector<32x16xf32>, vector<8x16xf32> -> vector<8x16xf32>
      %97 = arith.subf %11, %96 : vector<8x16xf32>
      %cst_56 = arith.constant dense<0.000000e+00> : vector<8x32xf32>
      %98 = tpu.matmul %97, %2, %cst_56 {dimension_numbers = #tpu.dot_dimension_numbers<[1], [0], [0], [1], [0, 0, 1, 1], [], []>} : vector<8x16xf32>, vector<16x32xf32>, vector<8x32xf32> -> vector<8x32xf32>
      %99 = arith.addf %98, %8 : vector<8x32xf32>
      %100 = math.tanh %99 : vector<8x32xf32>
      %cst_57 = arith.constant dense<0.000000e+00> : vector<8x16xf32>
      %101 = tpu.matmul %100, %3, %cst_57 {dimension_numbers = #tpu.dot_dimension_numbers<[1], [0], [0], [1], [0, 0, 1, 1], [], []>} : vector<8x32xf32>, vector<32x16xf32>, vector<8x16xf32> -> vector<8x16xf32>
      %102 = arith.subf %11, %101 : vector<8x16xf32>
      %c1_i32 = arith.constant 1 : i32
      %103 = arith.addi %arg12, %c1_i32 : i32
      scf.yield %102, %97, %103 : vector<8x16xf32>, vector<8x16xf32>, i32
    }
    %cst_18 = arith.constant dense<0.000000e+00> : vector<8x32xf32>
    %23 = tpu.matmul %22#0, %2, %cst_18 {dimension_numbers = #tpu.dot_dimension_numbers<[1], [0], [0], [1], [0, 0, 1, 1], [], []>} : vector<8x16xf32>, vector<16x32xf32>, vector<8x32xf32> -> vector<8x32xf32>
    %24 = arith.addf %23, %8 : vector<8x32xf32>
    %25 = math.tanh %24 : vector<8x32xf32>
    %26 = arith.mulf %25, %25 : vector<8x32xf32>
    %cst_19 = arith.constant 1.000000e+00 : f32
    %27 = vector.broadcast %cst_19 : f32 to vector<8x32xf32>
    %28 = arith.subf %27, %26 : vector<8x32xf32>
    %cst_20 = arith.constant 0.000000e+00 : f32
    %29 = vector.broadcast %cst_20 : f32 to vector<8x16xf32>
    %cst_21 = arith.constant dense<0.000000e+00> : vector<8x32xf32>
    %30 = tpu.matmul %1, %5, %cst_21 {dimension_numbers = #tpu.dot_dimension_numbers<[1], [0], [0], [1], [0, 0, 1, 1], [], []>} : vector<8x16xf32>, vector<16x32xf32>, vector<8x32xf32> -> vector<8x32xf32>
    %31 = arith.mulf %30, %28 : vector<8x32xf32>
    %cst_22 = arith.constant dense<0.000000e+00> : vector<8x16xf32>
    %32 = tpu.matmul %31, %4, %cst_22 {dimension_numbers = #tpu.dot_dimension_numbers<[1], [0], [0], [1], [0, 0, 1, 1], [], []>} : vector<8x32xf32>, vector<32x16xf32>, vector<8x16xf32> -> vector<8x16xf32>
    %cst_23 = arith.constant 1.000000e+00 : f32
    %33 = vector.broadcast %cst_23 : f32 to vector<8x16xf32>
    %34 = arith.mulf %33, %32 : vector<8x16xf32>
    %35 = arith.addf %29, %34 : vector<8x16xf32>
    %cst_24 = arith.constant dense<0.000000e+00> : vector<8x32xf32>
    %36 = tpu.matmul %32, %5, %cst_24 {dimension_numbers = #tpu.dot_dimension_numbers<[1], [0], [0], [1], [0, 0, 1, 1], [], []>} : vector<8x16xf32>, vector<16x32xf32>, vector<8x32xf32> -> vector<8x32xf32>
    %37 = arith.mulf %36, %28 : vector<8x32xf32>
    %cst_25 = arith.constant dense<0.000000e+00> : vector<8x16xf32>
    %38 = tpu.matmul %37, %4, %cst_25 {dimension_numbers = #tpu.dot_dimension_numbers<[1], [0], [0], [1], [0, 0, 1, 1], [], []>} : vector<8x32xf32>, vector<32x16xf32>, vector<8x16xf32> -> vector<8x16xf32>
    %cst_26 = arith.constant -5.000000e-01 : f32
    %39 = vector.broadcast %cst_26 : f32 to vector<8x16xf32>
    %40 = arith.mulf %39, %38 : vector<8x16xf32>
    %41 = arith.addf %35, %40 : vector<8x16xf32>
    %cst_27 = arith.constant dense<0.000000e+00> : vector<8x32xf32>
    %42 = tpu.matmul %38, %5, %cst_27 {dimension_numbers = #tpu.dot_dimension_numbers<[1], [0], [0], [1], [0, 0, 1, 1], [], []>} : vector<8x16xf32>, vector<16x32xf32>, vector<8x32xf32> -> vector<8x32xf32>
    %43 = arith.mulf %42, %28 : vector<8x32xf32>
    %cst_28 = arith.constant dense<0.000000e+00> : vector<8x16xf32>
    %44 = tpu.matmul %43, %4, %cst_28 {dimension_numbers = #tpu.dot_dimension_numbers<[1], [0], [0], [1], [0, 0, 1, 1], [], []>} : vector<8x32xf32>, vector<32x16xf32>, vector<8x16xf32> -> vector<8x16xf32>
    %cst_29 = arith.constant 0.333333343 : f32
    %45 = vector.broadcast %cst_29 : f32 to vector<8x16xf32>
    %46 = arith.mulf %45, %44 : vector<8x16xf32>
    %47 = arith.addf %41, %46 : vector<8x16xf32>
    %cst_30 = arith.constant dense<0.000000e+00> : vector<8x32xf32>
    %48 = tpu.matmul %44, %5, %cst_30 {dimension_numbers = #tpu.dot_dimension_numbers<[1], [0], [0], [1], [0, 0, 1, 1], [], []>} : vector<8x16xf32>, vector<16x32xf32>, vector<8x32xf32> -> vector<8x32xf32>
    %49 = arith.mulf %48, %28 : vector<8x32xf32>
    %cst_31 = arith.constant dense<0.000000e+00> : vector<8x16xf32>
    %50 = tpu.matmul %49, %4, %cst_31 {dimension_numbers = #tpu.dot_dimension_numbers<[1], [0], [0], [1], [0, 0, 1, 1], [], []>} : vector<8x32xf32>, vector<32x16xf32>, vector<8x16xf32> -> vector<8x16xf32>
    %cst_32 = arith.constant -2.500000e-01 : f32
    %51 = vector.broadcast %cst_32 : f32 to vector<8x16xf32>
    %52 = arith.mulf %51, %50 : vector<8x16xf32>
    %53 = arith.addf %47, %52 : vector<8x16xf32>
    %cst_33 = arith.constant dense<0.000000e+00> : vector<8x32xf32>
    %54 = tpu.matmul %50, %5, %cst_33 {dimension_numbers = #tpu.dot_dimension_numbers<[1], [0], [0], [1], [0, 0, 1, 1], [], []>} : vector<8x16xf32>, vector<16x32xf32>, vector<8x32xf32> -> vector<8x32xf32>
    %55 = arith.mulf %54, %28 : vector<8x32xf32>
    %cst_34 = arith.constant dense<0.000000e+00> : vector<8x16xf32>
    %56 = tpu.matmul %55, %4, %cst_34 {dimension_numbers = #tpu.dot_dimension_numbers<[1], [0], [0], [1], [0, 0, 1, 1], [], []>} : vector<8x32xf32>, vector<32x16xf32>, vector<8x16xf32> -> vector<8x16xf32>
    %cst_35 = arith.constant 2.000000e-01 : f32
    %57 = vector.broadcast %cst_35 : f32 to vector<8x16xf32>
    %58 = arith.mulf %57, %56 : vector<8x16xf32>
    %59 = arith.addf %53, %58 : vector<8x16xf32>
    %cst_36 = arith.constant dense<0.000000e+00> : vector<8x32xf32>
    %60 = tpu.matmul %56, %5, %cst_36 {dimension_numbers = #tpu.dot_dimension_numbers<[1], [0], [0], [1], [0, 0, 1, 1], [], []>} : vector<8x16xf32>, vector<16x32xf32>, vector<8x32xf32> -> vector<8x32xf32>
    %61 = arith.mulf %60, %28 : vector<8x32xf32>
    %cst_37 = arith.constant dense<0.000000e+00> : vector<8x16xf32>
    %62 = tpu.matmul %61, %4, %cst_37 {dimension_numbers = #tpu.dot_dimension_numbers<[1], [0], [0], [1], [0, 0, 1, 1], [], []>} : vector<8x32xf32>, vector<32x16xf32>, vector<8x16xf32> -> vector<8x16xf32>
    %cst_38 = arith.constant -0.166666672 : f32
    %63 = vector.broadcast %cst_38 : f32 to vector<8x16xf32>
    %64 = arith.mulf %63, %62 : vector<8x16xf32>
    %65 = arith.addf %59, %64 : vector<8x16xf32>
    %cst_39 = arith.constant dense<0.000000e+00> : vector<8x32xf32>
    %66 = tpu.matmul %62, %5, %cst_39 {dimension_numbers = #tpu.dot_dimension_numbers<[1], [0], [0], [1], [0, 0, 1, 1], [], []>} : vector<8x16xf32>, vector<16x32xf32>, vector<8x32xf32> -> vector<8x32xf32>
    %67 = arith.mulf %66, %28 : vector<8x32xf32>
    %cst_40 = arith.constant dense<0.000000e+00> : vector<8x16xf32>
    %68 = tpu.matmul %67, %4, %cst_40 {dimension_numbers = #tpu.dot_dimension_numbers<[1], [0], [0], [1], [0, 0, 1, 1], [], []>} : vector<8x32xf32>, vector<32x16xf32>, vector<8x16xf32> -> vector<8x16xf32>
    %cst_41 = arith.constant 0.142857149 : f32
    %69 = vector.broadcast %cst_41 : f32 to vector<8x16xf32>
    %70 = arith.mulf %69, %68 : vector<8x16xf32>
    %71 = arith.addf %65, %70 : vector<8x16xf32>
    %cst_42 = arith.constant dense<0.000000e+00> : vector<8x32xf32>
    %72 = tpu.matmul %68, %5, %cst_42 {dimension_numbers = #tpu.dot_dimension_numbers<[1], [0], [0], [1], [0, 0, 1, 1], [], []>} : vector<8x16xf32>, vector<16x32xf32>, vector<8x32xf32> -> vector<8x32xf32>
    %73 = arith.mulf %72, %28 : vector<8x32xf32>
    %cst_43 = arith.constant dense<0.000000e+00> : vector<8x16xf32>
    %74 = tpu.matmul %73, %4, %cst_43 {dimension_numbers = #tpu.dot_dimension_numbers<[1], [0], [0], [1], [0, 0, 1, 1], [], []>} : vector<8x32xf32>, vector<32x16xf32>, vector<8x16xf32> -> vector<8x16xf32>
    %cst_44 = arith.constant -1.250000e-01 : f32
    %75 = vector.broadcast %cst_44 : f32 to vector<8x16xf32>
    %76 = arith.mulf %75, %74 : vector<8x16xf32>
    %77 = arith.addf %71, %76 : vector<8x16xf32>
    %c0_45 = arith.constant 0 : index
    %c0_46 = arith.constant 0 : index
    %78 = vector.load %arg8[%c0_45, %c0_46] : memref<8x16xf32, #tpu.memory_space<vmem>>, vector<8x16xf32>
    tpu.vector_store %arg8[%c0_45, %c0_46], %22#0 {strides = array<i32>} : memref<8x16xf32, #tpu.memory_space<vmem>>, vector<8x16xf32>,
    %79 = arith.mulf %77, %1 : vector<8x16xf32>
    %cst_47 = arith.constant dense<0.000000e+00> : vector<8xf32>
    %80 = vector.multi_reduction <add>, %79, %cst_47 [1] : vector<8x16xf32> to vector<8xf32>
    %81 = vector.shape_cast %80 : vector<8xf32> to vector<8x1xf32>
    %c0_48 = arith.constant 0 : index
    %c0_49 = arith.constant 0 : index
    %82 = vector.load %arg9[%c0_48, %c0_49] : memref<8x1xf32, #tpu.memory_space<vmem>>, vector<8x1xf32>
    tpu.vector_store %arg9[%c0_48, %c0_49], %81 {strides = array<i32>} : memref<8x1xf32, #tpu.memory_space<vmem>>, vector<8x1xf32>,
    return
  }
}

</mosaic_0001>

<llo_original>
// kernel: residual_forward.1
$region0: #{residual_forward.1}
  #allocation0 [shape = 'u32[]', space=smem, size = 0x4, offset = 0x4, fixed_abs, tag = 'smem constant byte address 0x4 - core index']
  #allocation1 [shape = 'u32[144,128]{1,0:T(1,128)}', space=vmem, size = 0x12000, scoped, tag = 'internal scratch']
  %s0 = inlined_call_operand.vmem [shape: f32[8,16], index: 0, kind: input, shape index: {}]
  %s1 = inlined_call_operand.vmem [shape: f32[8,16], index: 1, kind: input, shape index: {}]
  %s2 = inlined_call_operand.vmem [shape: f32[16,32], index: 2, kind: input, shape index: {}]
  %s3 = inlined_call_operand.vmem [shape: f32[1,32], index: 3, kind: input, shape index: {}]
  %s4 = inlined_call_operand.vmem [shape: f32[32,16], index: 4, kind: input, shape index: {}]
  %s5 = inlined_call_operand.vmem [shape: f32[1,16], index: 5, kind: input, shape index: {}]
  %s6 = inlined_call_operand.vmem [shape: f32[32,16], index: 6, kind: input, shape index: {}]
  %s7 = inlined_call_operand.vmem [shape: f32[16,32], index: 7, kind: input, shape index: {}]
  %s8 = inlined_call_operand.hbm [shape: f32[8,16], index: 8, kind: output, shape index: {0}]
  %s9 = inlined_call_operand.vmem [shape: f32[8,1], index: 9, kind: output, shape index: {1}]
  %10 = xla_tuple %s8, %s9
  %s11 = sld [smem:[#allocation0]]
  $region57: #{residual_forward.1} parent=0
    _
  %s13 = ssub.s32 1, %s11
  %s14 = scalar_select 0, %s13, %s11
  $region1: #{residual_forward.1} parent=0
    #allocation2 [shape = 'u8[4096]{0}', space=vmem, size = 0x1000, scoped, tag = 'output window, operand 0, single buffered']
    #allocation3 [shape = 's32[1]{0}', space=sflag, size = 0x4, scoped, tag = 'scoped memory for residual_forward.1']
    %15 = vsyncpa [#allocation3], 0
    // Predicated region
    $region2: #{residual_forward.1} parent=1 // pred_check
      _
    $region3: #{residual_forward.1} parent=1 // pred_check_branch
      %17 = sbr.rel (0) target = $region5
    $region4: #{residual_forward.1} parent=1 // pred_region
      _
    $region5: #{residual_forward.1} parent=1 // pred_fallthru
      _
    // Predicated region
    $region6: #{residual_forward.1} parent=1 // pred_check
      _
    $region7: #{residual_forward.1} parent=1 // pred_check_branch
      %19 = sbr.rel (0) target = $region9
    $region8: #{residual_forward.1} parent=1 // pred_region
      _
    $region9: #{residual_forward.1} parent=1 // pred_fallthru
      _
    // Predicated region
    $region10: #{residual_forward.1} parent=1 // pred_check
      _
    $region11: #{residual_forward.1} parent=1 // pred_check_branch
      %21 = sbr.rel (0) target = $region13
    $region12: #{residual_forward.1} parent=1 // pred_region
      _
    $region13: #{residual_forward.1} parent=1 // pred_fallthru
      _
    // Predicated region
    $region14: #{residual_forward.1} parent=1 // pred_check
      _
    $region15: #{residual_forward.1} parent=1 // pred_check_branch
      %23 = sbr.rel (0) target = $region17
    $region16: #{residual_forward.1} parent=1 // pred_region
      _
    $region17: #{residual_forward.1} parent=1 // pred_fallthru
      _
    // Predicated region
    $region18: #{residual_forward.1} parent=1 // pred_check
      _
    $region19: #{residual_forward.1} parent=1 // pred_check_branch
      %25 = sbr.rel (0) target = $region21
    $region20: #{residual_forward.1} parent=1 // pred_region
      _
    $region21: #{residual_forward.1} parent=1 // pred_fallthru
      _
    // Predicated region
    $region22: #{residual_forward.1} parent=1 // pred_check
      _
    $region23: #{residual_forward.1} parent=1 // pred_check_branch
      %27 = sbr.rel (0) target = $region25
    $region24: #{residual_forward.1} parent=1 // pred_region
      _
    $region25: #{residual_forward.1} parent=1 // pred_fallthru
      _
    // Predicated region
    $region26: #{residual_forward.1} parent=1 // pred_check
      _
    $region27: #{residual_forward.1} parent=1 // pred_check_branch
      %29 = sbr.rel (0) target = $region29
    $region28: #{residual_forward.1} parent=1 // pred_region
      _
    $region29: #{residual_forward.1} parent=1 // pred_fallthru
      _
    // Predicated region
    $region30: #{residual_forward.1} parent=1 // pred_check
      _
    $region31: #{residual_forward.1} parent=1 // pred_check_branch
      %31 = sbr.rel (0) target = $region33
    $region32: #{residual_forward.1} parent=1 // pred_region
      _
    $region33: #{residual_forward.1} parent=1 // pred_fallthru
      _
    %v32 = vld [vmem:[%s0] sm:$0xff]
    %v33 = vld [vmem:[%s1] sm:$0xff]
    %v34 = vld [vmem:[%s2] sm:$0xff]
    %v35 = vld [vmem:[%s2 + $0x8] sm:$0xff]
    %v36 = vld [vmem:[%s4] sm:$0xff]
    %v37 = vld [vmem:[%s4 + $0x8] sm:$0xff]
    %v38 = vld [vmem:[%s4 + $0x10] sm:$0xff]
    %v39 = vld [vmem:[%s4 + $0x18] sm:$0xff]
    %v40 = vld [vmem:[%s6] sm:$0xff]
    %v41 = vld [vmem:[%s6 + $0x8] sm:$0xff]
    %v42 = vld [vmem:[%s6 + $0x10] sm:$0xff]
    %v43 = vld [vmem:[%s6 + $0x18] sm:$0xff]
    %v44 = vld [vmem:[%s7] sm:$0xff]
    %v45 = vld [vmem:[%s7 + $0x8] sm:$0xff]
    %v46 = vld [vmem:[%s3] sm:$0x1]
    %v48 = vlaneseq
    %v49 = vshrl.u32 %v48, 7
    %v50 = vsub.s32 0, %v49
    %v51 = vrot.slane %v46, %v50
    %v53 = vld [vmem:[%s5] sm:$0x1]
    %v55 = vlaneseq
    %v56 = vshrl.u32 %v55, 7
    %v57 = vsub.s32 0, %v56
    %v58 = vrot.slane %v53, %v57
    %v60 = vsub.f32 %v32, %v58
    %v61 = vand.u32 2147483647, %v32
    %v62 = vmul.f32 %v61, 1e-05
    %v63 = vadd.f32 %v62, 1e-05
    %vm64 = vcmask 130048
    %v66 = vsel %vm64, %v32, 0
    %68 = vmatprep.subr.mxu0 0.0
    %69 = vmatpush1.msra.mxu0 0.0
    %70 = vmatprep.subr.mxu0 0.0
    %71 = vmatpush1.msra.mxu0 0.0
    %72 = vmatprep.subr.mxu0 0.0
    %73 = vmatpush1.msra.mxu0 0.0
    %74 = vmatprep.subr.mxu0 0.0
    %75 = vmatpush1.msra.mxu0 0.0
    %76 = vmatprep.subr.mxu0 0.0
    %77 = vmatpush1.msra.mxu0 0.0
    %78 = vmatprep.subr.mxu0 0.0
    %79 = vmatpush1.msra.mxu0 0.0
    %80 = vmatprep.subr.mxu0 0.0
    %81 = vmatpush1.msra.mxu0 0.0
    %82 = vmatprep.subr.mxu0 0.0
    %83 = vmatpush1.msra.mxu0 0.0
    %84 = vmatprep.subr.mxu0 0.0
    %85 = vmatpush1.msra.mxu0 0.0
    %86 = vmatprep.subr.mxu0 0.0
    %87 = vmatpush1.msra.mxu0 0.0
    %88 = vmatprep.subr.mxu0 0.0
    %89 = vmatpush1.msra.mxu0 0.0
    %90 = vmatprep.subr.mxu0 0.0
    %91 = vmatpush1.msra.mxu0 0.0
    %92 = vmatprep.subr.mxu0 0.0
    %93 = vmatpush1.msra.mxu0 0.0
    %94 = vmatprep.subr.mxu0 0.0
    %95 = vmatpush1.msra.mxu0 0.0
    %96 = vmatprep.subr.mxu0 0.0
    %97 = vmatpush1.msra.mxu0 %v35
    %98 = vmatprep.subr.mxu0 0.0
    %99 = vmatpush1.msra.mxu0 %v34
    %100 = vmatprep.subr.mxu0 0.0
    %101 = vmatpush2.msra.mxu0 0.0
    %102 = vmatprep.subr.mxu0 0.0
    %103 = vmatpush2.msra.mxu0 0.0
    %104 = vmatprep.subr.mxu0 0.0
    %105 = vmatpush2.msra.mxu0 0.0
    %106 = vmatprep.subr.mxu0 0.0
    %107 = vmatpush2.msra.mxu0 0.0
    %108 = vmatprep.subr.mxu0 0.0
    %109 = vmatpush2.msra.mxu0 0.0
    %110 = vmatprep.subr.mxu0 0.0
    %111 = vmatpush2.msra.mxu0 0.0
    %112 = vmatprep.subr.mxu0 0.0
    %113 = vmatpush2.msra.mxu0 0.0
    %114 = vmatprep.subr.mxu0 0.0
    %115 = vmatpush2.msra.mxu0 0.0
    %116 = vmatprep.subr.mxu0 0.0
    %117 = vmatpush2.msra.mxu0 0.0
    %118 = vmatprep.subr.mxu0 0.0
    %119 = vmatpush2.msra.mxu0 0.0
    %120 = vmatprep.subr.mxu0 0.0
    %121 = vmatpush2.msra.mxu0 0.0
    %122 = vmatprep.subr.mxu0 0.0
    %123 = vmatpush2.msra.mxu0 0.0
    %124 = vmatprep.subr.mxu0 0.0
    %125 = vmatpush2.msra.mxu0 0.0
    %126 = vmatprep.subr.mxu0 0.0
    %127 = vmatpush2.msra.mxu0 0.0
    %128 = vmatprep.subr.mxu0 0.0
    %129 = vmatpush2.msra.mxu0 0.0
    %130 = vmatprep.subr.mxu0 0.0
    %131 = vmatpush2.msra.mxu0 0.0
    %132 = vmatprep.mubr.f32.mxu0 0.0
    %133 = vmatmul.mubr.f32.gmra.mxu0 %v66
    %v134 = vpop.f32.mrf.mxu0
    %v135 = vadd.f32 %v51, %v134
    %v136 = vpop.f32.mrf.mxu0
    %137 = vdwg.mxu0
    %v138 = vtanh.pop %v135
    %vm139 = vcmask 261120
    %v141 = vsel %vm139, %v138, 0
    %143 = vmatprep.subr.mxu0 0.0
    %144 = vmatpush1.msra.mxu0 0.0
    %145 = vmatprep.subr.mxu0 0.0
    %146 = vmatpush1.msra.mxu0 0.0
    %147 = vmatprep.subr.mxu0 0.0
    %148 = vmatpush1.msra.mxu0 0.0
    %149 = vmatprep.subr.mxu0 0.0
    %150 = vmatpush1.msra.mxu0 0.0
    %151 = vmatprep.subr.mxu0 0.0
    %152 = vmatpush1.msra.mxu0 0.0
    %153 = vmatprep.subr.mxu0 0.0
    %154 = vmatpush1.msra.mxu0 0.0
    %155 = vmatprep.subr.mxu0 0.0
    %156 = vmatpush1.msra.mxu0 0.0
    %157 = vmatprep.subr.mxu0 0.0
    %158 = vmatpush1.msra.mxu0 0.0
    %159 = vmatprep.subr.mxu0 0.0
    %160 = vmatpush1.msra.mxu0 0.0
    %161 = vmatprep.subr.mxu0 0.0
    %162 = vmatpush1.msra.mxu0 0.0
    %163 = vmatprep.subr.mxu0 0.0
    %164 = vmatpush1.msra.mxu0 0.0
    %165 = vmatprep.subr.mxu0 0.0
    %166 = vmatpush1.msra.mxu0 0.0
    %167 = vmatprep.subr.mxu0 0.0
    %168 = vmatpush1.msra.mxu0 %v39
    %169 = vmatprep.subr.mxu0 0.0
    %170 = vmatpush1.msra.mxu0 %v38
    %171 = vmatprep.subr.mxu0 0.0
    %172 = vmatpush1.msra.mxu0 %v37
    %173 = vmatprep.subr.mxu0 0.0
    %174 = vmatpush1.msra.mxu0 %v36
    %175 = vmatprep.subr.mxu0 0.0
    %176 = vmatpush2.msra.mxu0 0.0
    %177 = vmatprep.subr.mxu0 0.0
    %178 = vmatpush2.msra.mxu0 0.0
    %179 = vmatprep.subr.mxu0 0.0
    %180 = vmatpush2.msra.mxu0 0.0
    %181 = vmatprep.subr.mxu0 0.0
    %182 = vmatpush2.msra.mxu0 0.0
    %183 = vmatprep.subr.mxu0 0.0
    %184 = vmatpush2.msra.mxu0 0.0
    %185 = vmatprep.subr.mxu0 0.0
    %186 = vmatpush2.msra.mxu0 0.0
    %187 = vmatprep.subr.mxu0 0.0
    %188 = vmatpush2.msra.mxu0 0.0
    %189 = vmatprep.subr.mxu0 0.0
    %190 = vmatpush2.msra.mxu0 0.0
    %191 = vmatprep.subr.mxu0 0.0
    %192 = vmatpush2.msra.mxu0 0.0
    %193 = vmatprep.subr.mxu0 0.0
    %194 = vmatpush2.msra.mxu0 0.0
    %195 = vmatprep.subr.mxu0 0.0
    %196 = vmatpush2.msra.mxu0 0.0
    %197 = vmatprep.subr.mxu0 0.0
    %198 = vmatpush2.msra.mxu0 0.0
    %199 = vmatprep.subr.mxu0 0.0
    %200 = vmatpush2.msra.mxu0 0.0
    %201 = vmatprep.subr.mxu0 0.0
    %202 = vmatpush2.msra.mxu0 0.0
    %203 = vmatprep.subr.mxu0 0.0
    %204 = vmatpush2.msra.mxu0 0.0
    %205 = vmatprep.subr.mxu0 0.0
    %206 = vmatpush2.msra.mxu0 0.0
    %207 = vmatprep.mubr.f32.mxu0 0.0
    %208 = vmatmul.mubr.f32.gmra.mxu0 %v141
    %v209 = vpop.f32.mrf.mxu0
    %v210 = vadd.f32 0.0, %v209
    %v211 = vpop.f32.mrf.mxu0
    %212 = vdwg.mxu0
    %v213 = vsub.f32 %v60, %v210
    // While loop
    $region34: #{residual_forward.1} parent=1 // loop_pre_header
      _
    $region35: #{residual_forward.1} parent=1 // loop_header
      %v215 = vphi %v213, %v829
      %v216 = vphi %v32, %v681
      %s217 = sphi 0, %s830
      %v218 = vsub.f32 %v215, %v216
      %v219 = vmul.f32 %v218, %v218
      %vm220 = vcmp.ge.f32.partialorder %v219, %v63
      %v221 = vsel %vm220, 1.0, 0.0
      %v222 = vsel %vm64, %v221, -inf
      %223 = vmax.xlane.f32.xlu0 %v222
      %v224 = vpop.xlane.xlu0 %223
      %v225 = vrot.slane %v224, 4
      %v226 = vmax.f32 %v224, %v225
      %v227 = vrot.slane %v226, 2
      %v228 = vmax.f32 %v226, %v227
      %v229 = vrot.slane %v228, 1
      %v230 = vmax.f32 %v228, %v229
      %s231 = vtos %v230
      %p232 = scmp.gt.f32.partialorder %s231, 0.0
      %p233 = scmp.lt.s32.totalorder %s217, 250
      %p234 = pnand %p232, %p233
      %p235 = pneg %p234
    $region36: #{residual_forward.1} parent=1 // loop_header_branch
      %237 = sbr.rel (%p234) target = $region40
    $region37: #{residual_forward.1} parent=1 // loop_body
      %v239 = vsel %vm64, %v215, 0
      %241 = vmatprep.subr.mxu0 0.0
      %242 = vmatpush1.msra.mxu0 0.0
      %243 = vmatprep.subr.mxu0 0.0
      %244 = vmatpush1.msra.mxu0 0.0
      %245 = vmatprep.subr.mxu0 0.0
      %246 = vmatpush1.msra.mxu0 0.0
      %247 = vmatprep.subr.mxu0 0.0
      %248 = vmatpush1.msra.mxu0 0.0
      %249 = vmatprep.subr.mxu0 0.0
      %250 = vmatpush1.msra.mxu0 0.0
      %251 = vmatprep.subr.mxu0 0.0
      %252 = vmatpush1.msra.mxu0 0.0
      %253 = vmatprep.subr.mxu0 0.0
      %254 = vmatpush1.msra.mxu0 0.0
      %255 = vmatprep.subr.mxu0 0.0
      %256 = vmatpush1.msra.mxu0 0.0
      %257 = vmatprep.subr.mxu0 0.0
      %258 = vmatpush1.msra.mxu0 0.0
      %259 = vmatprep.subr.mxu0 0.0
      %260 = vmatpush1.msra.mxu0 0.0
      %261 = vmatprep.subr.mxu0 0.0
      %262 = vmatpush1.msra.mxu0 0.0
      %263 = vmatprep.subr.mxu0 0.0
      %264 = vmatpush1.msra.mxu0 0.0
      %265 = vmatprep.subr.mxu0 0.0
      %266 = vmatpush1.msra.mxu0 0.0
      %267 = vmatprep.subr.mxu0 0.0
      %268 = vmatpush1.msra.mxu0 0.0
      %269 = vmatprep.subr.mxu0 0.0
      %270 = vmatpush1.msra.mxu0 %v35
      %271 = vmatprep.subr.mxu0 0.0
      %272 = vmatpush1.msra.mxu0 %v34
      %273 = vmatprep.subr.mxu0 0.0
      %274 = vmatpush2.msra.mxu0 0.0
      %275 = vmatprep.subr.mxu0 0.0
      %276 = vmatpush2.msra.mxu0 0.0
      %277 = vmatprep.subr.mxu0 0.0
      %278 = vmatpush2.msra.mxu0 0.0
      %279 = vmatprep.subr.mxu0 0.0
      %280 = vmatpush2.msra.mxu0 0.0
      %281 = vmatprep.subr.mxu0 0.0
      %282 = vmatpush2.msra.mxu0 0.0
      %283 = vmatprep.subr.mxu0 0.0
      %284 = vmatpush2.msra.mxu0 0.0
      %285 = vmatprep.subr.mxu0 0.0
      %286 = vmatpush2.msra.mxu0 0.0
      %287 = vmatprep.subr.mxu0 0.0
      %288 = vmatpush2.msra.mxu0 0.0
      %289 = vmatprep.subr.mxu0 0.0
      %290 = vmatpush2.msra.mxu0 0.0
      %291 = vmatprep.subr.mxu0 0.0
      %292 = vmatpush2.msra.mxu0 0.0
      %293 = vmatprep.subr.mxu0 0.0
      %294 = vmatpush2.msra.mxu0 0.0
      %295 = vmatprep.subr.mxu0 0.0
      %296 = vmatpush2.msra.mxu0 0.0
      %297 = vmatprep.subr.mxu0 0.0
      %298 = vmatpush2.msra.mxu0 0.0
      %299 = vmatprep.subr.mxu0 0.0
      %300 = vmatpush2.msra.mxu0 0.0
      %301 = vmatprep.subr.mxu0 0.0
      %302 = vmatpush2.msra.mxu0 0.0
      %303 = vmatprep.subr.mxu0 0.0
      %304 = vmatpush2.msra.mxu0 0.0
      %305 = vmatprep.mubr.f32.mxu0 0.0
      %306 = vmatmul.mubr.f32.gmra.mxu0 %v239
      %v307 = vpop.f32.mrf.mxu0
      %v308 = vadd.f32 %v51, %v307
      %v309 = vpop.f32.mrf.mxu0
      %310 = vdwg.mxu0
      %v311 = vtanh.pop %v308
      %v313 = vsel %vm139, %v311, 0
      %315 = vmatprep.subr.mxu0 0.0
      %316 = vmatpush1.msra.mxu0 0.0
      %317 = vmatprep.subr.mxu0 0.0
      %318 = vmatpush1.msra.mxu0 0.0
      %319 = vmatprep.subr.mxu0 0.0
      %320 = vmatpush1.msra.mxu0 0.0
      %321 = vmatprep.subr.mxu0 0.0
      %322 = vmatpush1.msra.mxu0 0.0
      %323 = vmatprep.subr.mxu0 0.0
      %324 = vmatpush1.msra.mxu0 0.0
      %325 = vmatprep.subr.mxu0 0.0
      %326 = vmatpush1.msra.mxu0 0.0
      %327 = vmatprep.subr.mxu0 0.0
      %328 = vmatpush1.msra.mxu0 0.0
      %329 = vmatprep.subr.mxu0 0.0
      %330 = vmatpush1.msra.mxu0 0.0
      %331 = vmatprep.subr.mxu0 0.0
      %332 = vmatpush1.msra.mxu0 0.0
      %333 = vmatprep.subr.mxu0 0.0
      %334 = vmatpush1.msra.mxu0 0.0
      %335 = vmatprep.subr.mxu0 0.0
      %336 = vmatpush1.msra.mxu0 0.0
      %337 = vmatprep.subr.mxu0 0.0
      %338 = vmatpush1.msra.mxu0 0.0
      %339 = vmatprep.subr.mxu0 0.0
      %340 = vmatpush1.msra.mxu0 %v39
      %341 = vmatprep.subr.mxu0 0.0
      %342 = vmatpush1.msra.mxu0 %v38
      %343 = vmatprep.subr.mxu0 0.0
      %344 = vmatpush1.msra.mxu0 %v37
      %345 = vmatprep.subr.mxu0 0.0
      %346 = vmatpush1.msra.mxu0 %v36
      %347 = vmatprep.subr.mxu0 0.0
      %348 = vmatpush2.msra.mxu0 0.0
      %349 = vmatprep.subr.mxu0 0.0
      %350 = vmatpush2.msra.mxu0 0.0
      %351 = vmatprep.subr.mxu0 0.0
      %352 = vmatpush2.msra.mxu0 0.0
      %353 = vmatprep.subr.mxu0 0.0
      %354 = vmatpush2.msra.mxu0 0.0
      %355 = vmatprep.subr.mxu0 0.0
      %356 = vmatpush2.msra.mxu0 0.0
      %357 = vmatprep.subr.mxu0 0.0
      %358 = vmatpush2.msra.mxu0 0.0
      %359 = vmatprep.subr.mxu0 0.0
      %360 = vmatpush2.msra.mxu0 0.0
      %361 = vmatprep.subr.mxu0 0.0
      %362 = vmatpush2.msra.mxu0 0.0
      %363 = vmatprep.subr.mxu0 0.0
      %364 = vmatpush2.msra.mxu0 0.0
      %365 = vmatprep.subr.mxu0 0.0
      %366 = vmatpush2.msra.mxu0 0.0
      %367 = vmatprep.subr.mxu0 0.0
      %368 = vmatpush2.msra.mxu0 0.0
      %369 = vmatprep.subr.mxu0 0.0
      %370 = vmatpush2.msra.mxu0 0.0
      %371 = vmatprep.subr.mxu0 0.0
      %372 = vmatpush2.msra.mxu0 0.0
      %373 = vmatprep.subr.mxu0 0.0
      %374 = vmatpush2.msra.mxu0 0.0
      %375 = vmatprep.subr.mxu0 0.0
      %376 = vmatpush2.msra.mxu0 0.0
      %377 = vmatprep.subr.mxu0 0.0
      %378 = vmatpush2.msra.mxu0 0.0
      %379 = vmatprep.mubr.f32.mxu0 0.0
      %380 = vmatmul.mubr.f32.gmra.mxu0 %v313
      %v381 = vpop.f32.mrf.mxu0
      %v382 = vadd.f32 0.0, %v381
      %v383 = vpop.f32.mrf.mxu0
      %384 = vdwg.mxu0
      %v385 = vsub.f32 %v60, %v382
      %v387 = vsel %vm64, %v385, 0
      %389 = vmatprep.subr.mxu0 0.0
      %390 = vmatpush1.msra.mxu0 0.0
      %391 = vmatprep.subr.mxu0 0.0
      %392 = vmatpush1.msra.mxu0 0.0
      %393 = vmatprep.subr.mxu0 0.0
      %394 = vmatpush1.msra.mxu0 0.0
      %395 = vmatprep.subr.mxu0 0.0
      %396 = vmatpush1.msra.mxu0 0.0
      %397 = vmatprep.subr.mxu0 0.0
      %398 = vmatpush1.msra.mxu0 0.0
      %399 = vmatprep.subr.mxu0 0.0
      %400 = vmatpush1.msra.mxu0 0.0
      %401 = vmatprep.subr.mxu0 0.0
      %402 = vmatpush1.msra.mxu0 0.0
      %403 = vmatprep.subr.mxu0 0.0
      %404 = vmatpush1.msra.mxu0 0.0
      %405 = vmatprep.subr.mxu0 0.0
      %406 = vmatpush1.msra.mxu0 0.0
      %407 = vmatprep.subr.mxu0 0.0
      %408 = vmatpush1.msra.mxu0 0.0
      %409 = vmatprep.subr.mxu0 0.0
      %410 = vmatpush1.msra.mxu0 0.0
      %411 = vmatprep.subr.mxu0 0.0
      %412 = vmatpush1.msra.mxu0 0.0
      %413 = vmatprep.subr.mxu0 0.0
      %414 = vmatpush1.msra.mxu0 0.0
      %415 = vmatprep.subr.mxu0 0.0
      %416 = vmatpush1.msra.mxu0 0.0
      %417 = vmatprep.subr.mxu0 0.0
      %418 = vmatpush1.msra.mxu0 %v35
      %419 = vmatprep.subr.mxu0 0.0
      %420 = vmatpush1.msra.mxu0 %v34
      %421 = vmatprep.subr.mxu0 0.0
      %422 = vmatpush2.msra.mxu0 0.0
      %423 = vmatprep.subr.mxu0 0.0
      %424 = vmatpush2.msra.mxu0 0.0
      %425 = vmatprep.subr.mxu0 0.0
      %426 = vmatpush2.msra.mxu0 0.0
      %427 = vmatprep.subr.mxu0 0.0
      %428 = vmatpush2.msra.mxu0 0.0
      %429 = vmatprep.subr.mxu0 0.0
      %430 = vmatpush2.msra.mxu0 0.0
      %431 = vmatprep.subr.mxu0 0.0
      %432 = vmatpush2.msra.mxu0 0.0
      %433 = vmatprep.subr.mxu0 0.0
      %434 = vmatpush2.msra.mxu0 0.0
      %435 = vmatprep.subr.mxu0 0.0
      %436 = vmatpush2.msra.mxu0 0.0
      %437 = vmatprep.subr.mxu0 0.0
      %438 = vmatpush2.msra.mxu0 0.0
      %439 = vmatprep.subr.mxu0 0.0
      %440 = vmatpush2.msra.mxu0 0.0
      %441 = vmatprep.subr.mxu0 0.0
      %442 = vmatpush2.msra.mxu0 0.0
      %443 = vmatprep.subr.mxu0 0.0
      %444 = vmatpush2.msra.mxu0 0.0
      %445 = vmatprep.subr.mxu0 0.0
      %446 = vmatpush2.msra.mxu0 0.0
      %447 = vmatprep.subr.mxu0 0.0
      %448 = vmatpush2.msra.mxu0 0.0
      %449 = vmatprep.subr.mxu0 0.0
      %450 = vmatpush2.msra.mxu0 0.0
      %451 = vmatprep.subr.mxu0 0.0
      %452 = vmatpush2.msra.mxu0 0.0
      %453 = vmatprep.mubr.f32.mxu0 0.0
      %454 = vmatmul.mubr.f32.gmra.mxu0 %v387
      %v455 = vpop.f32.mrf.mxu0
      %v456 = vadd.f32 %v51, %v455
      %v457 = vpop.f32.mrf.mxu0
      %458 = vdwg.mxu0
      %v459 = vtanh.pop %v456
      %v461 = vsel %vm139, %v459, 0
      %463 = vmatprep.subr.mxu0 0.0
      %464 = vmatpush1.msra.mxu0 0.0
      %465 = vmatprep.subr.mxu0 0.0
      %466 = vmatpush1.msra.mxu0 0.0
      %467 = vmatprep.subr.mxu0 0.0
      %468 = vmatpush1.msra.mxu0 0.0
      %469 = vmatprep.subr.mxu0 0.0
      %470 = vmatpush1.msra.mxu0 0.0
      %471 = vmatprep.subr.mxu0 0.0
      %472 = vmatpush1.msra.mxu0 0.0
      %473 = vmatprep.subr.mxu0 0.0
      %474 = vmatpush1.msra.mxu0 0.0
      %475 = vmatprep.subr.mxu0 0.0
      %476 = vmatpush1.msra.mxu0 0.0
      %477 = vmatprep.subr.mxu0 0.0
      %478 = vmatpush1.msra.mxu0 0.0
      %479 = vmatprep.subr.mxu0 0.0
      %480 = vmatpush1.msra.mxu0 0.0
      %481 = vmatprep.subr.mxu0 0.0
      %482 = vmatpush1.msra.mxu0 0.0
      %483 = vmatprep.subr.mxu0 0.0
      %484 = vmatpush1.msra.mxu0 0.0
      %485 = vmatprep.subr.mxu0 0.0
      %486 = vmatpush1.msra.mxu0 0.0
      %487 = vmatprep.subr.mxu0 0.0
      %488 = vmatpush1.msra.mxu0 %v39
      %489 = vmatprep.subr.mxu0 0.0
      %490 = vmatpush1.msra.mxu0 %v38
      %491 = vmatprep.subr.mxu0 0.0
      %492 = vmatpush1.msra.mxu0 %v37
      %493 = vmatprep.subr.mxu0 0.0
      %494 = vmatpush1.msra.mxu0 %v36
      %495 = vmatprep.subr.mxu0 0.0
      %496 = vmatpush2.msra.mxu0 0.0
      %497 = vmatprep.subr.mxu0 0.0
      %498 = vmatpush2.msra.mxu0 0.0
      %499 = vmatprep.subr.mxu0 0.0
      %500 = vmatpush2.msra.mxu0 0.0
      %501 = vmatprep.subr.mxu0 0.0
      %502 = vmatpush2.msra.mxu0 0.0
      %503 = vmatprep.subr.mxu0 0.0
      %504 = vmatpush2.msra.mxu0 0.0
      %505 = vmatprep.subr.mxu0 0.0
      %506 = vmatpush2.msra.mxu0 0.0
      %507 = vmatprep.subr.mxu0 0.0
      %508 = vmatpush2.msra.mxu0 0.0
      %509 = vmatprep.subr.mxu0 0.0
      %510 = vmatpush2.msra.mxu0 0.0
      %511 = vmatprep.subr.mxu0 0.0
      %512 = vmatpush2.msra.mxu0 0.0
      %513 = vmatprep.subr.mxu0 0.0
      %514 = vmatpush2.msra.mxu0 0.0
      %515 = vmatprep.subr.mxu0 0.0
      %516 = vmatpush2.msra.mxu0 0.0
      %517 = vmatprep.subr.mxu0 0.0
      %518 = vmatpush2.msra.mxu0 0.0
      %519 = vmatprep.subr.mxu0 0.0
      %520 = vmatpush2.msra.mxu0 0.0
      %521 = vmatprep.subr.mxu0 0.0
      %522 = vmatpush2.msra.mxu0 0.0
      %523 = vmatprep.subr.mxu0 0.0
      %524 = vmatpush2.msra.mxu0 0.0
      %525 = vmatprep.subr.mxu0 0.0
      %526 = vmatpush2.msra.mxu0 0.0
      %527 = vmatprep.mubr.f32.mxu0 0.0
      %528 = vmatmul.mubr.f32.gmra.mxu0 %v461
      %v529 = vpop.f32.mrf.mxu0
      %v530 = vadd.f32 0.0, %v529
      %v531 = vpop.f32.mrf.mxu0
      %532 = vdwg.mxu0
      %v533 = vsub.f32 %v60, %v530
      %v535 = vsel %vm64, %v533, 0
      %537 = vmatprep.subr.mxu0 0.0
      %538 = vmatpush1.msra.mxu0 0.0
      %539 = vmatprep.subr.mxu0 0.0
      %540 = vmatpush1.msra.mxu0 0.0
      %541 = vmatprep.subr.mxu0 0.0
      %542 = vmatpush1.msra.mxu0 0.0
      %543 = vmatprep.subr.mxu0 0.0
      %544 = vmatpush1.msra.mxu0 0.0
      %545 = vmatprep.subr.mxu0 0.0
      %546 = vmatpush1.msra.mxu0 0.0
      %547 = vmatprep.subr.mxu0 0.0
      %548 = vmatpush1.msra.mxu0 0.0
      %549 = vmatprep.subr.mxu0 0.0
      %550 = vmatpush1.msra.mxu0 0.0
      %551 = vmatprep.subr.mxu0 0.0
      %552 = vmatpush1.msra.mxu0 0.0
      %553 = vmatprep.subr.mxu0 0.0
      %554 = vmatpush1.msra.mxu0 0.0
      %555 = vmatprep.subr.mxu0 0.0
      %556 = vmatpush1.msra.mxu0 0.0
      %557 = vmatprep.subr.mxu0 0.0
      %558 = vmatpush1.msra.mxu0 0.0
      %559 = vmatprep.subr.mxu0 0.0
      %560 = vmatpush1.msra.mxu0 0.0
      %561 = vmatprep.subr.mxu0 0.0
      %562 = vmatpush1.msra.mxu0 0.0
      %563 = vmatprep.subr.mxu0 0.0
      %564 = vmatpush1.msra.mxu0 0.0
      %565 = vmatprep.subr.mxu0 0.0
      %566 = vmatpush1.msra.mxu0 %v35
      %567 = vmatprep.subr.mxu0 0.0
      %568 = vmatpush1.msra.mxu0 %v34
      %569 = vmatprep.subr.mxu0 0.0
      %570 = vmatpush2.msra.mxu0 0.0
      %571 = vmatprep.subr.mxu0 0.0
      %572 = vmatpush2.msra.mxu0 0.0
      %573 = vmatprep.subr.mxu0 0.0
      %574 = vmatpush2.msra.mxu0 0.0
      %575 = vmatprep.subr.mxu0 0.0
      %576 = vmatpush2.msra.mxu0 0.0
      %577 = vmatprep.subr.mxu0 0.0
      %578 = vmatpush2.msra.mxu0 0.0
      %579 = vmatprep.subr.mxu0 0.0
      %580 = vmatpush2.msra.mxu0 0.0
      %581 = vmatprep.subr.mxu0 0.0
      %582 = vmatpush2.msra.mxu0 0.0
      %583 = vmatprep.subr.mxu0 0.0
      %584 = vmatpush2.msra.mxu0 0.0
      %585 = vmatprep.subr.mxu0 0.0
      %586 = vmatpush2.msra.mxu0 0.0
      %587 = vmatprep.subr.mxu0 0.0
      %588 = vmatpush2.msra.mxu0 0.0
      %589 = vmatprep.subr.mxu0 0.0
      %590 = vmatpush2.msra.mxu0 0.0
      %591 = vmatprep.subr.mxu0 0.0
      %592 = vmatpush2.msra.mxu0 0.0
      %593 = vmatprep.subr.mxu0 0.0
      %594 = vmatpush2.msra.mxu0 0.0
      %595 = vmatprep.subr.mxu0 0.0
      %596 = vmatpush2.msra.mxu0 0.0
      %597 = vmatprep.subr.mxu0 0.0
      %598 = vmatpush2.msra.mxu0 0.0
      %599 = vmatprep.subr.mxu0 0.0
      %600 = vmatpush2.msra.mxu0 0.0
      %601 = vmatprep.mubr.f32.mxu0 0.0
      %602 = vmatmul.mubr.f32.gmra.mxu0 %v535
      %v603 = vpop.f32.mrf.mxu0
      %v604 = vadd.f32 %v51, %v603
      %v605 = vpop.f32.mrf.mxu0
      %606 = vdwg.mxu0
      %v607 = vtanh.pop %v604
      %v609 = vsel %vm139, %v607, 0
      %611 = vmatprep.subr.mxu0 0.0
      %612 = vmatpush1.msra.mxu0 0.0
      %613 = vmatprep.subr.mxu0 0.0
      %614 = vmatpush1.msra.mxu0 0.0
      %615 = vmatprep.subr.mxu0 0.0
      %616 = vmatpush1.msra.mxu0 0.0
      %617 = vmatprep.subr.mxu0 0.0
      %618 = vmatpush1.msra.mxu0 0.0
      %619 = vmatprep.subr.mxu0 0.0
      %620 = vmatpush1.msra.mxu0 0.0
      %621 = vmatprep.subr.mxu0 0.0
      %622 = vmatpush1.msra.mxu0 0.0
      %623 = vmatprep.subr.mxu0 0.0
      %624 = vmatpush1.msra.mxu0 0.0
      %625 = vmatprep.subr.mxu0 0.0
      %626 = vmatpush1.msra.mxu0 0.0
      %627 = vmatprep.subr.mxu0 0.0
      %628 = vmatpush1.msra.mxu0 0.0
      %629 = vmatprep.subr.mxu0 0.0
      %630 = vmatpush1.msra.mxu0 0.0
      %631 = vmatprep.subr.mxu0 0.0
      %632 = vmatpush1.msra.mxu0 0.0
      %633 = vmatprep.subr.mxu0 0.0
      %634 = vmatpush1.msra.mxu0 0.0
      %635 = vmatprep.subr.mxu0 0.0
      %636 = vmatpush1.msra.mxu0 %v39
      %637 = vmatprep.subr.mxu0 0.0
      %638 = vmatpush1.msra.mxu0 %v38
      %639 = vmatprep.subr.mxu0 0.0
      %640 = vmatpush1.msra.mxu0 %v37
      %641 = vmatprep.subr.mxu0 0.0
      %642 = vmatpush1.msra.mxu0 %v36
      %643 = vmatprep.subr.mxu0 0.0
      %644 = vmatpush2.msra.mxu0 0.0
      %645 = vmatprep.subr.mxu0 0.0
      %646 = vmatpush2.msra.mxu0 0.0
      %647 = vmatprep.subr.mxu0 0.0
      %648 = vmatpush2.msra.mxu0 0.0
      %649 = vmatprep.subr.mxu0 0.0
      %650 = vmatpush2.msra.mxu0 0.0
      %651 = vmatprep.subr.mxu0 0.0
      %652 = vmatpush2.msra.mxu0 0.0
      %653 = vmatprep.subr.mxu0 0.0
      %654 = vmatpush2.msra.mxu0 0.0
      %655 = vmatprep.subr.mxu0 0.0
      %656 = vmatpush2.msra.mxu0 0.0
      %657 = vmatprep.subr.mxu0 0.0
      %658 = vmatpush2.msra.mxu0 0.0
      %659 = vmatprep.subr.mxu0 0.0
      %660 = vmatpush2.msra.mxu0 0.0
      %661 = vmatprep.subr.mxu0 0.0
      %662 = vmatpush2.msra.mxu0 0.0
      %663 = vmatprep.subr.mxu0 0.0
      %664 = vmatpush2.msra.mxu0 0.0
      %665 = vmatprep.subr.mxu0 0.0
      %666 = vmatpush2.msra.mxu0 0.0
      %667 = vmatprep.subr.mxu0 0.0
      %668 = vmatpush2.msra.mxu0 0.0
      %669 = vmatprep.subr.mxu0 0.0
      %670 = vmatpush2.msra.mxu0 0.0
      %671 = vmatprep.subr.mxu0 0.0
      %672 = vmatpush2.msra.mxu0 0.0
      %673 = vmatprep.subr.mxu0 0.0
      %674 = vmatpush2.msra.mxu0 0.0
      %675 = vmatprep.mubr.f32.mxu0 0.0
      %676 = vmatmul.mubr.f32.gmra.mxu0 %v609
      %v677 = vpop.f32.mrf.mxu0
      %v678 = vadd.f32 0.0, %v677
      %v679 = vpop.f32.mrf.mxu0
      %680 = vdwg.mxu0
      %v681 = vsub.f32 %v60, %v678
      %v683 = vsel %vm64, %v681, 0
      %685 = vmatprep.subr.mxu0 0.0
      %686 = vmatpush1.msra.mxu0 0.0
      %687 = vmatprep.subr.mxu0 0.0
      %688 = vmatpush1.msra.mxu0 0.0
      %689 = vmatprep.subr.mxu0 0.0
      %690 = vmatpush1.msra.mxu0 0.0
      %691 = vmatprep.subr.mxu0 0.0
      %692 = vmatpush1.msra.mxu0 0.0
      %693 = vmatprep.subr.mxu0 0.0
      %694 = vmatpush1.msra.mxu0 0.0
      %695 = vmatprep.subr.mxu0 0.0
      %696 = vmatpush1.msra.mxu0 0.0
      %697 = vmatprep.subr.mxu0 0.0
      %698 = vmatpush1.msra.mxu0 0.0
      %699 = vmatprep.subr.mxu0 0.0
      %700 = vmatpush1.msra.mxu0 0.0
      %701 = vmatprep.subr.mxu0 0.0
      %702 = vmatpush1.msra.mxu0 0.0
      %703 = vmatprep.subr.mxu0 0.0
      %704 = vmatpush1.msra.mxu0 0.0
      %705 = vmatprep.subr.mxu0 0.0
      %706 = vmatpush1.msra.mxu0 0.0
      %707 = vmatprep.subr.mxu0 0.0
      %708 = vmatpush1.msra.mxu0 0.0
      %709 = vmatprep.subr.mxu0 0.0
      %710 = vmatpush1.msra.mxu0 0.0
      %711 = vmatprep.subr.mxu0 0.0
      %712 = vmatpush1.msra.mxu0 0.0
      %713 = vmatprep.subr.mxu0 0.0
      %714 = vmatpush1.msra.mxu0 %v35
      %715 = vmatprep.subr.mxu0 0.0
      %716 = vmatpush1.msra.mxu0 %v34
      %717 = vmatprep.subr.mxu0 0.0
      %718 = vmatpush2.msra.mxu0 0.0
      %719 = vmatprep.subr.mxu0 0.0
      %720 = vmatpush2.msra.mxu0 0.0
      %721 = vmatprep.subr.mxu0 0.0
      %722 = vmatpush2.msra.mxu0 0.0
      %723 = vmatprep.subr.mxu0 0.0
      %724 = vmatpush2.msra.mxu0 0.0
      %725 = vmatprep.subr.mxu0 0.0
      %726 = vmatpush2.msra.mxu0 0.0
      %727 = vmatprep.subr.mxu0 0.0
      %728 = vmatpush2.msra.mxu0 0.0
      %729 = vmatprep.subr.mxu0 0.0
      %730 = vmatpush2.msra.mxu0 0.0
      %731 = vmatprep.subr.mxu0 0.0
      %732 = vmatpush2.msra.mxu0 0.0
      %733 = vmatprep.subr.mxu0 0.0
      %734 = vmatpush2.msra.mxu0 0.0
      %735 = vmatprep.subr.mxu0 0.0
      %736 = vmatpush2.msra.mxu0 0.0
      %737 = vmatprep.subr.mxu0 0.0
      %738 = vmatpush2.msra.mxu0 0.0
      %739 = vmatprep.subr.mxu0 0.0
      %740 = vmatpush2.msra.mxu0 0.0
      %741 = vmatprep.subr.mxu0 0.0
      %742 = vmatpush2.msra.mxu0 0.0
      %743 = vmatprep.subr.mxu0 0.0
      %744 = vmatpush2.msra.mxu0 0.0
      %745 = vmatprep.subr.mxu0 0.0
      %746 = vmatpush2.msra.mxu0 0.0
      %747 = vmatprep.subr.mxu0 0.0
      %748 = vmatpush2.msra.mxu0 0.0
      %749 = vmatprep.mubr.f32.mxu0 0.0
      %750 = vmatmul.mubr.f32.gmra.mxu0 %v683
      %v751 = vpop.f32.mrf.mxu0
      %v752 = vadd.f32 %v51, %v751
      %v753 = vpop.f32.mrf.mxu0
      %754 = vdwg.mxu0
      %v755 = vtanh.pop %v752
      %v757 = vsel %vm139, %v755, 0
      %759 = vmatprep.subr.mxu0 0.0
      %760 = vmatpush1.msra.mxu0 0.0
      %761 = vmatprep.subr.mxu0 0.0
      %762 = vmatpush1.msra.mxu0 0.0
      %763 = vmatprep.subr.mxu0 0.0
      %764 = vmatpush1.msra.mxu0 0.0
      %765 = vmatprep.subr.mxu0 0.0
      %766 = vmatpush1.msra.mxu0 0.0
      %767 = vmatprep.subr.mxu0 0.0
      %768 = vmatpush1.msra.mxu0 0.0
      %769 = vmatprep.subr.mxu0 0.0
      %770 = vmatpush1.msra.mxu0 0.0
      %771 = vmatprep.subr.mxu0 0.0
      %772 = vmatpush1.msra.mxu0 0.0
      %773 = vmatprep.subr.mxu0 0.0
      %774 = vmatpush1.msra.mxu0 0.0
      %775 = vmatprep.subr.mxu0 0.0
      %776 = vmatpush1.msra.mxu0 0.0
      %777 = vmatprep.subr.mxu0 0.0
      %778 = vmatpush1.msra.mxu0 0.0
      %779 = vmatprep.subr.mxu0 0.0
      %780 = vmatpush1.msra.mxu0 0.0
      %781 = vmatprep.subr.mxu0 0.0
      %782 = vmatpush1.msra.mxu0 0.0
      %783 = vmatprep.subr.mxu0 0.0
      %784 = vmatpush1.msra.mxu0 %v39
      %785 = vmatprep.subr.mxu0 0.0
      %786 = vmatpush1.msra.mxu0 %v38
      %787 = vmatprep.subr.mxu0 0.0
      %788 = vmatpush1.msra.mxu0 %v37
      %789 = vmatprep.subr.mxu0 0.0
      %790 = vmatpush1.msra.mxu0 %v36
      %791 = vmatprep.subr.mxu0 0.0
      %792 = vmatpush2.msra.mxu0 0.0
      %793 = vmatprep.subr.mxu0 0.0
      %794 = vmatpush2.msra.mxu0 0.0
      %795 = vmatprep.subr.mxu0 0.0
      %796 = vmatpush2.msra.mxu0 0.0
      %797 = vmatprep.subr.mxu0 0.0
      %798 = vmatpush2.msra.mxu0 0.0
      %799 = vmatprep.subr.mxu0 0.0
      %800 = vmatpush2.msra.mxu0 0.0
      %801 = vmatprep.subr.mxu0 0.0
      %802 = vmatpush2.msra.mxu0 0.0
      %803 = vmatprep.subr.mxu0 0.0
      %804 = vmatpush2.msra.mxu0 0.0
      %805 = vmatprep.subr.mxu0 0.0
      %806 = vmatpush2.msra.mxu0 0.0
      %807 = vmatprep.subr.mxu0 0.0
      %808 = vmatpush2.msra.mxu0 0.0
      %809 = vmatprep.subr.mxu0 0.0
      %810 = vmatpush2.msra.mxu0 0.0
      %811 = vmatprep.subr.mxu0 0.0
      %812 = vmatpush2.msra.mxu0 0.0
      %813 = vmatprep.subr.mxu0 0.0
      %814 = vmatpush2.msra.mxu0 0.0
      %815 = vmatprep.subr.mxu0 0.0
      %816 = vmatpush2.msra.mxu0 0.0
      %817 = vmatprep.subr.mxu0 0.0
      %818 = vmatpush2.msra.mxu0 0.0
      %819 = vmatprep.subr.mxu0 0.0
      %820 = vmatpush2.msra.mxu0 0.0
      %821 = vmatprep.subr.mxu0 0.0
      %822 = vmatpush2.msra.mxu0 0.0
      %823 = vmatprep.mubr.f32.mxu0 0.0
      %824 = vmatmul.mubr.f32.gmra.mxu0 %v757
      %v825 = vpop.f32.mrf.mxu0
      %v826 = vadd.f32 0.0, %v825
      %v827 = vpop.f32.mrf.mxu0
      %828 = vdwg.mxu0
      %v829 = vsub.f32 %v60, %v826
      %s830 = sadd.s32 %s217, 1
    $region38: #{residual_forward.1} parent=1 // loop_footer
      _
    $region39: #{residual_forward.1} parent=1 // loop_footer_branch
      %214 = sbr.rel target = $region35
    $region40: #{residual_forward.1} parent=1 // loop_exit
      _
    %v832 = vsel %vm64, %v215, 0
    %834 = vmatprep.subr.mxu0 0.0
    %835 = vmatpush1.msra.mxu0 0.0
    %836 = vmatprep.subr.mxu0 0.0
    %837 = vmatpush1.msra.mxu0 0.0
    %838 = vmatprep.subr.mxu0 0.0
    %839 = vmatpush1.msra.mxu0 0.0
    %840 = vmatprep.subr.mxu0 0.0
    %841 = vmatpush1.msra.mxu0 0.0
    %842 = vmatprep.subr.mxu0 0.0
    %843 = vmatpush1.msra.mxu0 0.0
    %844 = vmatprep.subr.mxu0 0.0
    %845 = vmatpush1.msra.mxu0 0.0
    %846 = vmatprep.subr.mxu0 0.0
    %847 = vmatpush1.msra.mxu0 0.0
    %848 = vmatprep.subr.mxu0 0.0
    %849 = vmatpush1.msra.mxu0 0.0
    %850 = vmatprep.subr.mxu0 0.0
    %851 = vmatpush1.msra.mxu0 0.0
    %852 = vmatprep.subr.mxu0 0.0
    %853 = vmatpush1.msra.mxu0 0.0
    %854 = vmatprep.subr.mxu0 0.0
    %855 = vmatpush1.msra.mxu0 0.0
    %856 = vmatprep.subr.mxu0 0.0
    %857 = vmatpush1.msra.mxu0 0.0
    %858 = vmatprep.subr.mxu0 0.0
    %859 = vmatpush1.msra.mxu0 0.0
    %860 = vmatprep.subr.mxu0 0.0
    %861 = vmatpush1.msra.mxu0 0.0
    %862 = vmatprep.subr.mxu0 0.0
    %863 = vmatpush1.msra.mxu0 %v35
    %864 = vmatprep.subr.mxu0 0.0
    %865 = vmatpush1.msra.mxu0 %v34
    %866 = vmatprep.subr.mxu0 0.0
    %867 = vmatpush2.msra.mxu0 0.0
    %868 = vmatprep.subr.mxu0 0.0
    %869 = vmatpush2.msra.mxu0 0.0
    %870 = vmatprep.subr.mxu0 0.0
    %871 = vmatpush2.msra.mxu0 0.0
    %872 = vmatprep.subr.mxu0 0.0
    %873 = vmatpush2.msra.mxu0 0.0
    %874 = vmatprep.subr.mxu0 0.0
    %875 = vmatpush2.msra.mxu0 0.0
    %876 = vmatprep.subr.mxu0 0.0
    %877 = vmatpush2.msra.mxu0 0.0
    %878 = vmatprep.subr.mxu0 0.0
    %879 = vmatpush2.msra.mxu0 0.0
    %880 = vmatprep.subr.mxu0 0.0
    %881 = vmatpush2.msra.mxu0 0.0
    %882 = vmatprep.subr.mxu0 0.0
    %883 = vmatpush2.msra.mxu0 0.0
    %884 = vmatprep.subr.mxu0 0.0
    %885 = vmatpush2.msra.mxu0 0.0
    %886 = vmatprep.subr.mxu0 0.0
    %887 = vmatpush2.msra.mxu0 0.0
    %888 = vmatprep.subr.mxu0 0.0
    %889 = vmatpush2.msra.mxu0 0.0
    %890 = vmatprep.subr.mxu0 0.0
    %891 = vmatpush2.msra.mxu0 0.0
    %892 = vmatprep.subr.mxu0 0.0
    %893 = vmatpush2.msra.mxu0 0.0
    %894 = vmatprep.subr.mxu0 0.0
    %895 = vmatpush2.msra.mxu0 0.0
    %896 = vmatprep.subr.mxu0 0.0
    %897 = vmatpush2.msra.mxu0 0.0
    %898 = vmatprep.mubr.f32.mxu0 0.0
    %899 = vmatmul.mubr.f32.gmra.mxu0 %v832
    %v900 = vpop.f32.mrf.mxu0
    %v901 = vadd.f32 %v51, %v900
    %v902 = vpop.f32.mrf.mxu0
    %903 = vdwg.mxu0
    %v904 = vtanh.pop %v901
    %v905 = vmul.f32 %v904, %v904
    %v906 = vsub.f32 1.0, %v905
    %v908 = vsel %vm64, %v33, 0
    %910 = vmatprep.subr.mxu0 0.0
    %911 = vmatpush1.msra.mxu0 0.0
    %912 = vmatprep.subr.mxu0 0.0
    %913 = vmatpush1.msra.mxu0 0.0
    %914 = vmatprep.subr.mxu0 0.0
    %915 = vmatpush1.msra.mxu0 0.0
    %916 = vmatprep.subr.mxu0 0.0
    %917 = vmatpush1.msra.mxu0 0.0
    %918 = vmatprep.subr.mxu0 0.0
    %919 = vmatpush1.msra.mxu0 0.0
    %920 = vmatprep.subr.mxu0 0.0
    %921 = vmatpush1.msra.mxu0 0.0
    %922 = vmatprep.subr.mxu0 0.0
    %923 = vmatpush1.msra.mxu0 0.0
    %924 = vmatprep.subr.mxu0 0.0
    %925 = vmatpush1.msra.mxu0 0.0
    %926 = vmatprep.subr.mxu0 0.0
    %927 = vmatpush1.msra.mxu0 0.0
    %928 = vmatprep.subr.mxu0 0.0
    %929 = vmatpush1.msra.mxu0 0.0
    %930 = vmatprep.subr.mxu0 0.0
    %931 = vmatpush1.msra.mxu0 0.0
    %932 = vmatprep.subr.mxu0 0.0
    %933 = vmatpush1.msra.mxu0 0.0
    %934 = vmatprep.subr.mxu0 0.0
    %935 = vmatpush1.msra.mxu0 0.0
    %936 = vmatprep.subr.mxu0 0.0
    %937 = vmatpush1.msra.mxu0 0.0
    %938 = vmatprep.subr.mxu0 0.0
    %939 = vmatpush1.msra.mxu0 %v45
    %940 = vmatprep.subr.mxu0 0.0
    %941 = vmatpush1.msra.mxu0 %v44
    %942 = vmatprep.subr.mxu0 0.0
    %943 = vmatpush2.msra.mxu0 0.0
    %944 = vmatprep.subr.mxu0 0.0
    %945 = vmatpush2.msra.mxu0 0.0
    %946 = vmatprep.subr.mxu0 0.0
    %947 = vmatpush2.msra.mxu0 0.0
    %948 = vmatprep.subr.mxu0 0.0
    %949 = vmatpush2.msra.mxu0 0.0
    %950 = vmatprep.subr.mxu0 0.0
    %951 = vmatpush2.msra.mxu0 0.0
    %952 = vmatprep.subr.mxu0 0.0
    %953 = vmatpush2.msra.mxu0 0.0
    %954 = vmatprep.subr.mxu0 0.0
    %955 = vmatpush2.msra.mxu0 0.0
    %956 = vmatprep.subr.mxu0 0.0
    %957 = vmatpush2.msra.mxu0 0.0
    %958 = vmatprep.subr.mxu0 0.0
    %959 = vmatpush2.msra.mxu0 0.0
    %960 = vmatprep.subr.mxu0 0.0
    %961 = vmatpush2.msra.mxu0 0.0
    %962 = vmatprep.subr.mxu0 0.0
    %963 = vmatpush2.msra.mxu0 0.0
    %964 = vmatprep.subr.mxu0 0.0
    %965 = vmatpush2.msra.mxu0 0.0
    %966 = vmatprep.subr.mxu0 0.0
    %967 = vmatpush2.msra.mxu0 0.0
    %968 = vmatprep.subr.mxu0 0.0
    %969 = vmatpush2.msra.mxu0 0.0
    %970 = vmatprep.subr.mxu0 0.0
    %971 = vmatpush2.msra.mxu0 0.0
    %972 = vmatprep.subr.mxu0 0.0
    %973 = vmatpush2.msra.mxu0 0.0
    %974 = vmatprep.mubr.f32.mxu0 0.0
    %975 = vmatmul.mubr.f32.gmra.mxu0 %v908
    %v976 = vpop.f32.mrf.mxu0
    %v977 = vadd.f32 0.0, %v976
    %v978 = vpop.f32.mrf.mxu0
    %979 = vdwg.mxu0
    %v980 = vmul.f32 %v977, %v906
    %v982 = vsel %vm139, %v980, 0
    %984 = vmatprep.subr.mxu0 0.0
    %985 = vmatpush1.msra.mxu0 0.0
    %986 = vmatprep.subr.mxu0 0.0
    %987 = vmatpush1.msra.mxu0 0.0
    %988 = vmatprep.subr.mxu0 0.0
    %989 = vmatpush1.msra.mxu0 0.0
    %990 = vmatprep.subr.mxu0 0.0
    %991 = vmatpush1.msra.mxu0 0.0
    %992 = vmatprep.subr.mxu0 0.0
    %993 = vmatpush1.msra.mxu0 0.0
    %994 = vmatprep.subr.mxu0 0.0
    %995 = vmatpush1.msra.mxu0 0.0
    %996 = vmatprep.subr.mxu0 0.0
    %997 = vmatpush1.msra.mxu0 0.0
    %998 = vmatprep.subr.mxu0 0.0
    %999 = vmatpush1.msra.mxu0 0.0
    %1000 = vmatprep.subr.mxu0 0.0
    %1001 = vmatpush1.msra.mxu0 0.0
    %1002 = vmatprep.subr.mxu0 0.0
    %1003 = vmatpush1.msra.mxu0 0.0
    %1004 = vmatprep.subr.mxu0 0.0
    %1005 = vmatpush1.msra.mxu0 0.0
    %1006 = vmatprep.subr.mxu0 0.0
    %1007 = vmatpush1.msra.mxu0 0.0
    %1008 = vmatprep.subr.mxu0 0.0
    %1009 = vmatpush1.msra.mxu0 %v43
    %1010 = vmatprep.subr.mxu0 0.0
    %1011 = vmatpush1.msra.mxu0 %v42
    %1012 = vmatprep.subr.mxu0 0.0
    %1013 = vmatpush1.msra.mxu0 %v41
    %1014 = vmatprep.subr.mxu0 0.0
    %1015 = vmatpush1.msra.mxu0 %v40
    %1016 = vmatprep.subr.mxu0 0.0
    %1017 = vmatpush2.msra.mxu0 0.0
    %1018 = vmatprep.subr.mxu0 0.0
    %1019 = vmatpush2.msra.mxu0 0.0
    %1020 = vmatprep.subr.mxu0 0.0
    %1021 = vmatpush2.msra.mxu0 0.0
    %1022 = vmatprep.subr.mxu0 0.0
    %1023 = vmatpush2.msra.mxu0 0.0
    %1024 = vmatprep.subr.mxu0 0.0
    %1025 = vmatpush2.msra.mxu0 0.0
    %1026 = vmatprep.subr.mxu0 0.0
    %1027 = vmatpush2.msra.mxu0 0.0
    %1028 = vmatprep.subr.mxu0 0.0
    %1029 = vmatpush2.msra.mxu0 0.0
    %1030 = vmatprep.subr.mxu0 0.0
    %1031 = vmatpush2.msra.mxu0 0.0
    %1032 = vmatprep.subr.mxu0 0.0
    %1033 = vmatpush2.msra.mxu0 0.0
    %1034 = vmatprep.subr.mxu0 0.0
    %1035 = vmatpush2.msra.mxu0 0.0
    %1036 = vmatprep.subr.mxu0 0.0
    %1037 = vmatpush2.msra.mxu0 0.0
    %1038 = vmatprep.subr.mxu0 0.0
    %1039 = vmatpush2.msra.mxu0 0.0
    %1040 = vmatprep.subr.mxu0 0.0
    %1041 = vmatpush2.msra.mxu0 0.0
    %1042 = vmatprep.subr.mxu0 0.0
    %1043 = vmatpush2.msra.mxu0 0.0
    %1044 = vmatprep.subr.mxu0 0.0
    %1045 = vmatpush2.msra.mxu0 0.0
    %1046 = vmatprep.subr.mxu0 0.0
    %1047 = vmatpush2.msra.mxu0 0.0
    %1048 = vmatprep.mubr.f32.mxu0 0.0
    %1049 = vmatmul.mubr.f32.gmra.mxu0 %v982
    %v1050 = vpop.f32.mrf.mxu0
    %v1051 = vadd.f32 0.0, %v1050
    %v1052 = vpop.f32.mrf.mxu0
    %1053 = vdwg.mxu0
    %v1054 = vadd.f32 %v1051, 0.0
    %v1056 = vsel %vm64, %v1051, 0
    %1058 = vmatprep.subr.mxu0 0.0
    %1059 = vmatpush1.msra.mxu0 0.0
    %1060 = vmatprep.subr.mxu0 0.0
    %1061 = vmatpush1.msra.mxu0 0.0
    %1062 = vmatprep.subr.mxu0 0.0
    %1063 = vmatpush1.msra.mxu0 0.0
    %1064 = vmatprep.subr.mxu0 0.0
    %1065 = vmatpush1.msra.mxu0 0.0
    %1066 = vmatprep.subr.mxu0 0.0
    %1067 = vmatpush1.msra.mxu0 0.0
    %1068 = vmatprep.subr.mxu0 0.0
    %1069 = vmatpush1.msra.mxu0 0.0
    %1070 = vmatprep.subr.mxu0 0.0
    %1071 = vmatpush1.msra.mxu0 0.0
    %1072 = vmatprep.subr.mxu0 0.0
    %1073 = vmatpush1.msra.mxu0 0.0
    %1074 = vmatprep.subr.mxu0 0.0
    %1075 = vmatpush1.msra.mxu0 0.0
    %1076 = vmatprep.subr.mxu0 0.0
    %1077 = vmatpush1.msra.mxu0 0.0
    %1078 = vmatprep.subr.mxu0 0.0
    %1079 = vmatpush1.msra.mxu0 0.0
    %1080 = vmatprep.subr.mxu0 0.0
    %1081 = vmatpush1.msra.mxu0 0.0
    %1082 = vmatprep.subr.mxu0 0.0
    %1083 = vmatpush1.msra.mxu0 0.0
    %1084 = vmatprep.subr.mxu0 0.0
    %1085 = vmatpush1.msra.mxu0 0.0
    %1086 = vmatprep.subr.mxu0 0.0
    %1087 = vmatpush1.msra.mxu0 %v45
    %1088 = vmatprep.subr.mxu0 0.0
    %1089 = vmatpush1.msra.mxu0 %v44
    %1090 = vmatprep.subr.mxu0 0.0
    %1091 = vmatpush2.msra.mxu0 0.0
    %1092 = vmatprep.subr.mxu0 0.0
    %1093 = vmatpush2.msra.mxu0 0.0
    %1094 = vmatprep.subr.mxu0 0.0
    %1095 = vmatpush2.msra.mxu0 0.0
    %1096 = vmatprep.subr.mxu0 0.0
    %1097 = vmatpush2.msra.mxu0 0.0
    %1098 = vmatprep.subr.mxu0 0.0
    %1099 = vmatpush2.msra.mxu0 0.0
    %1100 = vmatprep.subr.mxu0 0.0
    %1101 = vmatpush2.msra.mxu0 0.0
    %1102 = vmatprep.subr.mxu0 0.0
    %1103 = vmatpush2.msra.mxu0 0.0
    %1104 = vmatprep.subr.mxu0 0.0
    %1105 = vmatpush2.msra.mxu0 0.0
    %1106 = vmatprep.subr.mxu0 0.0
    %1107 = vmatpush2.msra.mxu0 0.0
    %1108 = vmatprep.subr.mxu0 0.0
    %1109 = vmatpush2.msra.mxu0 0.0
    %1110 = vmatprep.subr.mxu0 0.0
    %1111 = vmatpush2.msra.mxu0 0.0
    %1112 = vmatprep.subr.mxu0 0.0
    %1113 = vmatpush2.msra.mxu0 0.0
    %1114 = vmatprep.subr.mxu0 0.0
    %1115 = vmatpush2.msra.mxu0 0.0
    %1116 = vmatprep.subr.mxu0 0.0
    %1117 = vmatpush2.msra.mxu0 0.0
    %1118 = vmatprep.subr.mxu0 0.0
    %1119 = vmatpush2.msra.mxu0 0.0
    %1120 = vmatprep.subr.mxu0 0.0
    %1121 = vmatpush2.msra.mxu0 0.0
    %1122 = vmatprep.mubr.f32.mxu0 0.0
    %1123 = vmatmul.mubr.f32.gmra.mxu0 %v1056
    %v1124 = vpop.f32.mrf.mxu0
    %v1125 = vadd.f32 0.0, %v1124
    %v1126 = vpop.f32.mrf.mxu0
    %1127 = vdwg.mxu0
    %v1128 = vmul.f32 %v1125, %v906
    %v1130 = vsel %vm139, %v1128, 0
    %1132 = vmatprep.subr.mxu0 0.0
    %1133 = vmatpush1.msra.mxu0 0.0
    %1134 = vmatprep.subr.mxu0 0.0
    %1135 = vmatpush1.msra.mxu0 0.0
    %1136 = vmatprep.subr.mxu0 0.0
    %1137 = vmatpush1.msra.mxu0 0.0
    %1138 = vmatprep.subr.mxu0 0.0
    %1139 = vmatpush1.msra.mxu0 0.0
    %1140 = vmatprep.subr.mxu0 0.0
    %1141 = vmatpush1.msra.mxu0 0.0
    %1142 = vmatprep.subr.mxu0 0.0
    %1143 = vmatpush1.msra.mxu0 0.0
    %1144 = vmatprep.subr.mxu0 0.0
    %1145 = vmatpush1.msra.mxu0 0.0
    %1146 = vmatprep.subr.mxu0 0.0
    %1147 = vmatpush1.msra.mxu0 0.0
    %1148 = vmatprep.subr.mxu0 0.0
    %1149 = vmatpush1.msra.mxu0 0.0
    %1150 = vmatprep.subr.mxu0 0.0
    %1151 = vmatpush1.msra.mxu0 0.0
    %1152 = vmatprep.subr.mxu0 0.0
    %1153 = vmatpush1.msra.mxu0 0.0
    %1154 = vmatprep.subr.mxu0 0.0
    %1155 = vmatpush1.msra.mxu0 0.0
    %1156 = vmatprep.subr.mxu0 0.0
    %1157 = vmatpush1.msra.mxu0 %v43
    %1158 = vmatprep.subr.mxu0 0.0
    %1159 = vmatpush1.msra.mxu0 %v42
    %1160 = vmatprep.subr.mxu0 0.0
    %1161 = vmatpush1.msra.mxu0 %v41
    %1162 = vmatprep.subr.mxu0 0.0
    %1163 = vmatpush1.msra.mxu0 %v40
    %1164 = vmatprep.subr.mxu0 0.0
    %1165 = vmatpush2.msra.mxu0 0.0
    %1166 = vmatprep.subr.mxu0 0.0
    %1167 = vmatpush2.msra.mxu0 0.0
    %1168 = vmatprep.subr.mxu0 0.0
    %1169 = vmatpush2.msra.mxu0 0.0
    %1170 = vmatprep.subr.mxu0 0.0
    %1171 = vmatpush2.msra.mxu0 0.0
    %1172 = vmatprep.subr.mxu0 0.0
    %1173 = vmatpush2.msra.mxu0 0.0
    %1174 = vmatprep.subr.mxu0 0.0
    %1175 = vmatpush2.msra.mxu0 0.0
    %1176 = vmatprep.subr.mxu0 0.0
    %1177 = vmatpush2.msra.mxu0 0.0
    %1178 = vmatprep.subr.mxu0 0.0
    %1179 = vmatpush2.msra.mxu0 0.0
    %1180 = vmatprep.subr.mxu0 0.0
    %1181 = vmatpush2.msra.mxu0 0.0
    %1182 = vmatprep.subr.mxu0 0.0
    %1183 = vmatpush2.msra.mxu0 0.0
    %1184 = vmatprep.subr.mxu0 0.0
    %1185 = vmatpush2.msra.mxu0 0.0
    %1186 = vmatprep.subr.mxu0 0.0
    %1187 = vmatpush2.msra.mxu0 0.0
    %1188 = vmatprep.subr.mxu0 0.0
    %1189 = vmatpush2.msra.mxu0 0.0
    %1190 = vmatprep.subr.mxu0 0.0
    %1191 = vmatpush2.msra.mxu0 0.0
    %1192 = vmatprep.subr.mxu0 0.0
    %1193 = vmatpush2.msra.mxu0 0.0
    %1194 = vmatprep.subr.mxu0 0.0
    %1195 = vmatpush2.msra.mxu0 0.0
    %1196 = vmatprep.mubr.f32.mxu0 0.0
    %1197 = vmatmul.mubr.f32.gmra.mxu0 %v1130
    %v1198 = vpop.f32.mrf.mxu0
    %v1199 = vadd.f32 0.0, %v1198
    %v1200 = vpop.f32.mrf.mxu0
    %1201 = vdwg.mxu0
    %v1202 = vmul.f32 %v1199, -0.5
    %v1203 = vadd.f32 %v1054, %v1202
    %v1205 = vsel %vm64, %v1199, 0
    %1207 = vmatprep.subr.mxu0 0.0
    %1208 = vmatpush1.msra.mxu0 0.0
    %1209 = vmatprep.subr.mxu0 0.0
    %1210 = vmatpush1.msra.mxu0 0.0
    %1211 = vmatprep.subr.mxu0 0.0
    %1212 = vmatpush1.msra.mxu0 0.0
    %1213 = vmatprep.subr.mxu0 0.0
    %1214 = vmatpush1.msra.mxu0 0.0
    %1215 = vmatprep.subr.mxu0 0.0
    %1216 = vmatpush1.msra.mxu0 0.0
    %1217 = vmatprep.subr.mxu0 0.0
    %1218 = vmatpush1.msra.mxu0 0.0
    %1219 = vmatprep.subr.mxu0 0.0
    %1220 = vmatpush1.msra.mxu0 0.0
    %1221 = vmatprep.subr.mxu0 0.0
    %1222 = vmatpush1.msra.mxu0 0.0
    %1223 = vmatprep.subr.mxu0 0.0
    %1224 = vmatpush1.msra.mxu0 0.0
    %1225 = vmatprep.subr.mxu0 0.0
    %1226 = vmatpush1.msra.mxu0 0.0
    %1227 = vmatprep.subr.mxu0 0.0
    %1228 = vmatpush1.msra.mxu0 0.0
    %1229 = vmatprep.subr.mxu0 0.0
    %1230 = vmatpush1.msra.mxu0 0.0
    %1231 = vmatprep.subr.mxu0 0.0
    %1232 = vmatpush1.msra.mxu0 0.0
    %1233 = vmatprep.subr.mxu0 0.0
    %1234 = vmatpush1.msra.mxu0 0.0
    %1235 = vmatprep.subr.mxu0 0.0
    %1236 = vmatpush1.msra.mxu0 %v45
    %1237 = vmatprep.subr.mxu0 0.0
    %1238 = vmatpush1.msra.mxu0 %v44
    %1239 = vmatprep.subr.mxu0 0.0
    %1240 = vmatpush2.msra.mxu0 0.0
    %1241 = vmatprep.subr.mxu0 0.0
    %1242 = vmatpush2.msra.mxu0 0.0
    %1243 = vmatprep.subr.mxu0 0.0
    %1244 = vmatpush2.msra.mxu0 0.0
    %1245 = vmatprep.subr.mxu0 0.0
    %1246 = vmatpush2.msra.mxu0 0.0
    %1247 = vmatprep.subr.mxu0 0.0
    %1248 = vmatpush2.msra.mxu0 0.0
    %1249 = vmatprep.subr.mxu0 0.0
    %1250 = vmatpush2.msra.mxu0 0.0
    %1251 = vmatprep.subr.mxu0 0.0
    %1252 = vmatpush2.msra.mxu0 0.0
    %1253 = vmatprep.subr.mxu0 0.0
    %1254 = vmatpush2.msra.mxu0 0.0
    %1255 = vmatprep.subr.mxu0 0.0
    %1256 = vmatpush2.msra.mxu0 0.0
    %1257 = vmatprep.subr.mxu0 0.0
    %1258 = vmatpush2.msra.mxu0 0.0
    %1259 = vmatprep.subr.mxu0 0.0
    %1260 = vmatpush2.msra.mxu0 0.0
    %1261 = vmatprep.subr.mxu0 0.0
    %1262 = vmatpush2.msra.mxu0 0.0
    %1263 = vmatprep.subr.mxu0 0.0
    %1264 = vmatpush2.msra.mxu0 0.0
    %1265 = vmatprep.subr.mxu0 0.0
    %1266 = vmatpush2.msra.mxu0 0.0
    %1267 = vmatprep.subr.mxu0 0.0
    %1268 = vmatpush2.msra.mxu0 0.0
    %1269 = vmatprep.subr.mxu0 0.0
    %1270 = vmatpush2.msra.mxu0 0.0
    %1271 = vmatprep.mubr.f32.mxu0 0.0
    %1272 = vmatmul.mubr.f32.gmra.mxu0 %v1205
    %v1273 = vpop.f32.mrf.mxu0
    %v1274 = vadd.f32 0.0, %v1273
    %v1275 = vpop.f32.mrf.mxu0
    %1276 = vdwg.mxu0
    %v1277 = vmul.f32 %v1274, %v906
    %v1279 = vsel %vm139, %v1277, 0
    %1281 = vmatprep.subr.mxu0 0.0
    %1282 = vmatpush1.msra.mxu0 0.0
    %1283 = vmatprep.subr.mxu0 0.0
    %1284 = vmatpush1.msra.mxu0 0.0
    %1285 = vmatprep.subr.mxu0 0.0
    %1286 = vmatpush1.msra.mxu0 0.0
    %1287 = vmatprep.subr.mxu0 0.0
    %1288 = vmatpush1.msra.mxu0 0.0
    %1289 = vmatprep.subr.mxu0 0.0
    %1290 = vmatpush1.msra.mxu0 0.0
    %1291 = vmatprep.subr.mxu0 0.0
    %1292 = vmatpush1.msra.mxu0 0.0
    %1293 = vmatprep.subr.mxu0 0.0
    %1294 = vmatpush1.msra.mxu0 0.0
    %1295 = vmatprep.subr.mxu0 0.0
    %1296 = vmatpush1.msra.mxu0 0.0
    %1297 = vmatprep.subr.mxu0 0.0
    %1298 = vmatpush1.msra.mxu0 0.0
    %1299 = vmatprep.subr.mxu0 0.0
    %1300 = vmatpush1.msra.mxu0 0.0
    %1301 = vmatprep.subr.mxu0 0.0
    %1302 = vmatpush1.msra.mxu0 0.0
    %1303 = vmatprep.subr.mxu0 0.0
    %1304 = vmatpush1.msra.mxu0 0.0
    %1305 = vmatprep.subr.mxu0 0.0
    %1306 = vmatpush1.msra.mxu0 %v43
    %1307 = vmatprep.subr.mxu0 0.0
    %1308 = vmatpush1.msra.mxu0 %v42
    %1309 = vmatprep.subr.mxu0 0.0
    %1310 = vmatpush1.msra.mxu0 %v41
    %1311 = vmatprep.subr.mxu0 0.0
    %1312 = vmatpush1.msra.mxu0 %v40
    %1313 = vmatprep.subr.mxu0 0.0
    %1314 = vmatpush2.msra.mxu0 0.0
    %1315 = vmatprep.subr.mxu0 0.0
    %1316 = vmatpush2.msra.mxu0 0.0
    %1317 = vmatprep.subr.mxu0 0.0
    %1318 = vmatpush2.msra.mxu0 0.0
    %1319 = vmatprep.subr.mxu0 0.0
    %1320 = vmatpush2.msra.mxu0 0.0
    %1321 = vmatprep.subr.mxu0 0.0
    %1322 = vmatpush2.msra.mxu0 0.0
    %1323 = vmatprep.subr.mxu0 0.0
    %1324 = vmatpush2.msra.mxu0 0.0
    %1325 = vmatprep.subr.mxu0 0.0
    %1326 = vmatpush2.msra.mxu0 0.0
    %1327 = vmatprep.subr.mxu0 0.0
    %1328 = vmatpush2.msra.mxu0 0.0
    %1329 = vmatprep.subr.mxu0 0.0
    %1330 = vmatpush2.msra.mxu0 0.0
    %1331 = vmatprep.subr.mxu0 0.0
    %1332 = vmatpush2.msra.mxu0 0.0
    %1333 = vmatprep.subr.mxu0 0.0
    %1334 = vmatpush2.msra.mxu0 0.0
    %1335 = vmatprep.subr.mxu0 0.0
    %1336 = vmatpush2.msra.mxu0 0.0
    %1337 = vmatprep.subr.mxu0 0.0
    %1338 = vmatpush2.msra.mxu0 0.0
    %1339 = vmatprep.subr.mxu0 0.0
    %1340 = vmatpush2.msra.mxu0 0.0
    %1341 = vmatprep.subr.mxu0 0.0
    %1342 = vmatpush2.msra.mxu0 0.0
    %1343 = vmatprep.subr.mxu0 0.0
    %1344 = vmatpush2.msra.mxu0 0.0
    %1345 = vmatprep.mubr.f32.mxu0 0.0
    %1346 = vmatmul.mubr.f32.gmra.mxu0 %v1279
    %v1347 = vpop.f32.mrf.mxu0
    %v1348 = vadd.f32 0.0, %v1347
    %v1349 = vpop.f32.mrf.mxu0
    %1350 = vdwg.mxu0
    %v1351 = vmul.f32 %v1348, 0.33333334
    %v1352 = vadd.f32 %v1203, %v1351
    %v1354 = vsel %vm64, %v1348, 0
    %1356 = vmatprep.subr.mxu0 0.0
    %1357 = vmatpush1.msra.mxu0 0.0
    %1358 = vmatprep.subr.mxu0 0.0
    %1359 = vmatpush1.msra.mxu0 0.0
    %1360 = vmatprep.subr.mxu0 0.0
    %1361 = vmatpush1.msra.mxu0 0.0
    %1362 = vmatprep.subr.mxu0 0.0
    %1363 = vmatpush1.msra.mxu0 0.0
    %1364 = vmatprep.subr.mxu0 0.0
    %1365 = vmatpush1.msra.mxu0 0.0
    %1366 = vmatprep.subr.mxu0 0.0
    %1367 = vmatpush1.msra.mxu0 0.0
    %1368 = vmatprep.subr.mxu0 0.0
    %1369 = vmatpush1.msra.mxu0 0.0
    %1370 = vmatprep.subr.mxu0 0.0
    %1371 = vmatpush1.msra.mxu0 0.0
    %1372 = vmatprep.subr.mxu0 0.0
    %1373 = vmatpush1.msra.mxu0 0.0
    %1374 = vmatprep.subr.mxu0 0.0
    %1375 = vmatpush1.msra.mxu0 0.0
    %1376 = vmatprep.subr.mxu0 0.0
    %1377 = vmatpush1.msra.mxu0 0.0
    %1378 = vmatprep.subr.mxu0 0.0
    %1379 = vmatpush1.msra.mxu0 0.0
    %1380 = vmatprep.subr.mxu0 0.0
    %1381 = vmatpush1.msra.mxu0 0.0
    %1382 = vmatprep.subr.mxu0 0.0
    %1383 = vmatpush1.msra.mxu0 0.0
    %1384 = vmatprep.subr.mxu0 0.0
    %1385 = vmatpush1.msra.mxu0 %v45
    %1386 = vmatprep.subr.mxu0 0.0
    %1387 = vmatpush1.msra.mxu0 %v44
    %1388 = vmatprep.subr.mxu0 0.0
    %1389 = vmatpush2.msra.mxu0 0.0
    %1390 = vmatprep.subr.mxu0 0.0
    %1391 = vmatpush2.msra.mxu0 0.0
    %1392 = vmatprep.subr.mxu0 0.0
    %1393 = vmatpush2.msra.mxu0 0.0
    %1394 = vmatprep.subr.mxu0 0.0
    %1395 = vmatpush2.msra.mxu0 0.0
    %1396 = vmatprep.subr.mxu0 0.0
    %1397 = vmatpush2.msra.mxu0 0.0
    %1398 = vmatprep.subr.mxu0 0.0
    %1399 = vmatpush2.msra.mxu0 0.0
    %1400 = vmatprep.subr.mxu0 0.0
    %1401 = vmatpush2.msra.mxu0 0.0
    %1402 = vmatprep.subr.mxu0 0.0
    %1403 = vmatpush2.msra.mxu0 0.0
    %1404 = vmatprep.subr.mxu0 0.0
    %1405 = vmatpush2.msra.mxu0 0.0
    %1406 = vmatprep.subr.mxu0 0.0
    %1407 = vmatpush2.msra.mxu0 0.0
    %1408 = vmatprep.subr.mxu0 0.0
    %1409 = vmatpush2.msra.mxu0 0.0
    %1410 = vmatprep.subr.mxu0 0.0
    %1411 = vmatpush2.msra.mxu0 0.0
    %1412 = vmatprep.subr.mxu0 0.0
    %1413 = vmatpush2.msra.mxu0 0.0
    %1414 = vmatprep.subr.mxu0 0.0
    %1415 = vmatpush2.msra.mxu0 0.0
    %1416 = vmatprep.subr.mxu0 0.0
    %1417 = vmatpush2.msra.mxu0 0.0
    %1418 = vmatprep.subr.mxu0 0.0
    %1419 = vmatpush2.msra.mxu0 0.0
    %1420 = vmatprep.mubr.f32.mxu0 0.0
    %1421 = vmatmul.mubr.f32.gmra.mxu0 %v1354
    %v1422 = vpop.f32.mrf.mxu0
    %v1423 = vadd.f32 0.0, %v1422
    %v1424 = vpop.f32.mrf.mxu0
    %1425 = vdwg.mxu0
    %v1426 = vmul.f32 %v1423, %v906
    %v1428 = vsel %vm139, %v1426, 0
    %1430 = vmatprep.subr.mxu0 0.0
    %1431 = vmatpush1.msra.mxu0 0.0
    %1432 = vmatprep.subr.mxu0 0.0
    %1433 = vmatpush1.msra.mxu0 0.0
    %1434 = vmatprep.subr.mxu0 0.0
    %1435 = vmatpush1.msra.mxu0 0.0
    %1436 = vmatprep.subr.mxu0 0.0
    %1437 = vmatpush1.msra.mxu0 0.0
    %1438 = vmatprep.subr.mxu0 0.0
    %1439 = vmatpush1.msra.mxu0 0.0
    %1440 = vmatprep.subr.mxu0 0.0
    %1441 = vmatpush1.msra.mxu0 0.0
    %1442 = vmatprep.subr.mxu0 0.0
    %1443 = vmatpush1.msra.mxu0 0.0
    %1444 = vmatprep.subr.mxu0 0.0
    %1445 = vmatpush1.msra.mxu0 0.0
    %1446 = vmatprep.subr.mxu0 0.0
    %1447 = vmatpush1.msra.mxu0 0.0
    %1448 = vmatprep.subr.mxu0 0.0
    %1449 = vmatpush1.msra.mxu0 0.0
    %1450 = vmatprep.subr.mxu0 0.0
    %1451 = vmatpush1.msra.mxu0 0.0
    %1452 = vmatprep.subr.mxu0 0.0
    %1453 = vmatpush1.msra.mxu0 0.0
    %1454 = vmatprep.subr.mxu0 0.0
    %1455 = vmatpush1.msra.mxu0 %v43
    %1456 = vmatprep.subr.mxu0 0.0
    %1457 = vmatpush1.msra.mxu0 %v42
    %1458 = vmatprep.subr.mxu0 0.0
    %1459 = vmatpush1.msra.mxu0 %v41
    %1460 = vmatprep.subr.mxu0 0.0
    %1461 = vmatpush1.msra.mxu0 %v40
    %1462 = vmatprep.subr.mxu0 0.0
    %1463 = vmatpush2.msra.mxu0 0.0
    %1464 = vmatprep.subr.mxu0 0.0
    %1465 = vmatpush2.msra.mxu0 0.0
    %1466 = vmatprep.subr.mxu0 0.0
    %1467 = vmatpush2.msra.mxu0 0.0
    %1468 = vmatprep.subr.mxu0 0.0
    %1469 = vmatpush2.msra.mxu0 0.0
    %1470 = vmatprep.subr.mxu0 0.0
    %1471 = vmatpush2.msra.mxu0 0.0
    %1472 = vmatprep.subr.mxu0 0.0
    %1473 = vmatpush2.msra.mxu0 0.0
    %1474 = vmatprep.subr.mxu0 0.0
    %1475 = vmatpush2.msra.mxu0 0.0
    %1476 = vmatprep.subr.mxu0 0.0
    %1477 = vmatpush2.msra.mxu0 0.0
    %1478 = vmatprep.subr.mxu0 0.0
    %1479 = vmatpush2.msra.mxu0 0.0
    %1480 = vmatprep.subr.mxu0 0.0
    %1481 = vmatpush2.msra.mxu0 0.0
    %1482 = vmatprep.subr.mxu0 0.0
    %1483 = vmatpush2.msra.mxu0 0.0
    %1484 = vmatprep.subr.mxu0 0.0
    %1485 = vmatpush2.msra.mxu0 0.0
    %1486 = vmatprep.subr.mxu0 0.0
    %1487 = vmatpush2.msra.mxu0 0.0
    %1488 = vmatprep.subr.mxu0 0.0
    %1489 = vmatpush2.msra.mxu0 0.0
    %1490 = vmatprep.subr.mxu0 0.0
    %1491 = vmatpush2.msra.mxu0 0.0
    %1492 = vmatprep.subr.mxu0 0.0
    %1493 = vmatpush2.msra.mxu0 0.0
    %1494 = vmatprep.mubr.f32.mxu0 0.0
    %1495 = vmatmul.mubr.f32.gmra.mxu0 %v1428
    %v1496 = vpop.f32.mrf.mxu0
    %v1497 = vadd.f32 0.0, %v1496
    %v1498 = vpop.f32.mrf.mxu0
    %1499 = vdwg.mxu0
    %v1500 = vmul.f32 %v1497, -0.25
    %v1501 = vadd.f32 %v1352, %v1500
    %v1503 = vsel %vm64, %v1497, 0
    %1505 = vmatprep.subr.mxu0 0.0
    %1506 = vmatpush1.msra.mxu0 0.0
    %1507 = vmatprep.subr.mxu0 0.0
    %1508 = vmatpush1.msra.mxu0 0.0
    %1509 = vmatprep.subr.mxu0 0.0
    %1510 = vmatpush1.msra.mxu0 0.0
    %1511 = vmatprep.subr.mxu0 0.0
    %1512 = vmatpush1.msra.mxu0 0.0
    %1513 = vmatprep.subr.mxu0 0.0
    %1514 = vmatpush1.msra.mxu0 0.0
    %1515 = vmatprep.subr.mxu0 0.0
    %1516 = vmatpush1.msra.mxu0 0.0
    %1517 = vmatprep.subr.mxu0 0.0
    %1518 = vmatpush1.msra.mxu0 0.0
    %1519 = vmatprep.subr.mxu0 0.0
    %1520 = vmatpush1.msra.mxu0 0.0
    %1521 = vmatprep.subr.mxu0 0.0
    %1522 = vmatpush1.msra.mxu0 0.0
    %1523 = vmatprep.subr.mxu0 0.0
    %1524 = vmatpush1.msra.mxu0 0.0
    %1525 = vmatprep.subr.mxu0 0.0
    %1526 = vmatpush1.msra.mxu0 0.0
    %1527 = vmatprep.subr.mxu0 0.0
    %1528 = vmatpush1.msra.mxu0 0.0
    %1529 = vmatprep.subr.mxu0 0.0
    %1530 = vmatpush1.msra.mxu0 0.0
    %1531 = vmatprep.subr.mxu0 0.0
    %1532 = vmatpush1.msra.mxu0 0.0
    %1533 = vmatprep.subr.mxu0 0.0
    %1534 = vmatpush1.msra.mxu0 %v45
    %1535 = vmatprep.subr.mxu0 0.0
    %1536 = vmatpush1.msra.mxu0 %v44
    %1537 = vmatprep.subr.mxu0 0.0
    %1538 = vmatpush2.msra.mxu0 0.0
    %1539 = vmatprep.subr.mxu0 0.0
    %1540 = vmatpush2.msra.mxu0 0.0
    %1541 = vmatprep.subr.mxu0 0.0
    %1542 = vmatpush2.msra.mxu0 0.0
    %1543 = vmatprep.subr.mxu0 0.0
    %1544 = vmatpush2.msra.mxu0 0.0
    %1545 = vmatprep.subr.mxu0 0.0
    %1546 = vmatpush2.msra.mxu0 0.0
    %1547 = vmatprep.subr.mxu0 0.0
    %1548 = vmatpush2.msra.mxu0 0.0
    %1549 = vmatprep.subr.mxu0 0.0
    %1550 = vmatpush2.msra.mxu0 0.0
    %1551 = vmatprep.subr.mxu0 0.0
    %1552 = vmatpush2.msra.mxu0 0.0
    %1553 = vmatprep.subr.mxu0 0.0
    %1554 = vmatpush2.msra.mxu0 0.0
    %1555 = vmatprep.subr.mxu0 0.0
    %1556 = vmatpush2.msra.mxu0 0.0
    %1557 = vmatprep.subr.mxu0 0.0
    %1558 = vmatpush2.msra.mxu0 0.0
    %1559 = vmatprep.subr.mxu0 0.0
    %1560 = vmatpush2.msra.mxu0 0.0
    %1561 = vmatprep.subr.mxu0 0.0
    %1562 = vmatpush2.msra.mxu0 0.0
    %1563 = vmatprep.subr.mxu0 0.0
    %1564 = vmatpush2.msra.mxu0 0.0
    %1565 = vmatprep.subr.mxu0 0.0
    %1566 = vmatpush2.msra.mxu0 0.0
    %1567 = vmatprep.subr.mxu0 0.0
    %1568 = vmatpush2.msra.mxu0 0.0
    %1569 = vmatprep.mubr.f32.mxu0 0.0
    %1570 = vmatmul.mubr.f32.gmra.mxu0 %v1503
    %v1571 = vpop.f32.mrf.mxu0
    %v1572 = vadd.f32 0.0, %v1571
    %v1573 = vpop.f32.mrf.mxu0
    %1574 = vdwg.mxu0
    %v1575 = vmul.f32 %v1572, %v906
    %v1577 = vsel %vm139, %v1575, 0
    %1579 = vmatprep.subr.mxu0 0.0
    %1580 = vmatpush1.msra.mxu0 0.0
    %1581 = vmatprep.subr.mxu0 0.0
    %1582 = vmatpush1.msra.mxu0 0.0
    %1583 = vmatprep.subr.mxu0 0.0
    %1584 = vmatpush1.msra.mxu0 0.0
    %1585 = vmatprep.subr.mxu0 0.0
    %1586 = vmatpush1.msra.mxu0 0.0
    %1587 = vmatprep.subr.mxu0 0.0
    %1588 = vmatpush1.msra.mxu0 0.0
    %1589 = vmatprep.subr.mxu0 0.0
    %1590 = vmatpush1.msra.mxu0 0.0
    %1591 = vmatprep.subr.mxu0 0.0
    %1592 = vmatpush1.msra.mxu0 0.0
    %1593 = vmatprep.subr.mxu0 0.0
    %1594 = vmatpush1.msra.mxu0 0.0
    %1595 = vmatprep.subr.mxu0 0.0
    %1596 = vmatpush1.msra.mxu0 0.0
    %1597 = vmatprep.subr.mxu0 0.0
    %1598 = vmatpush1.msra.mxu0 0.0
    %1599 = vmatprep.subr.mxu0 0.0
    %1600 = vmatpush1.msra.mxu0 0.0
    %1601 = vmatprep.subr.mxu0 0.0
    %1602 = vmatpush1.msra.mxu0 0.0
    %1603 = vmatprep.subr.mxu0 0.0
    %1604 = vmatpush1.msra.mxu0 %v43
    %1605 = vmatprep.subr.mxu0 0.0
    %1606 = vmatpush1.msra.mxu0 %v42
    %1607 = vmatprep.subr.mxu0 0.0
    %1608 = vmatpush1.msra.mxu0 %v41
    %1609 = vmatprep.subr.mxu0 0.0
    %1610 = vmatpush1.msra.mxu0 %v40
    %1611 = vmatprep.subr.mxu0 0.0
    %1612 = vmatpush2.msra.mxu0 0.0
    %1613 = vmatprep.subr.mxu0 0.0
    %1614 = vmatpush2.msra.mxu0 0.0
    %1615 = vmatprep.subr.mxu0 0.0
    %1616 = vmatpush2.msra.mxu0 0.0
    %1617 = vmatprep.subr.mxu0 0.0
    %1618 = vmatpush2.msra.mxu0 0.0
    %1619 = vmatprep.subr.mxu0 0.0
    %1620 = vmatpush2.msra.mxu0 0.0
    %1621 = vmatprep.subr.mxu0 0.0
    %1622 = vmatpush2.msra.mxu0 0.0
    %1623 = vmatprep.subr.mxu0 0.0
    %1624 = vmatpush2.msra.mxu0 0.0
    %1625 = vmatprep.subr.mxu0 0.0
    %1626 = vmatpush2.msra.mxu0 0.0
    %1627 = vmatprep.subr.mxu0 0.0
    %1628 = vmatpush2.msra.mxu0 0.0
    %1629 = vmatprep.subr.mxu0 0.0
    %1630 = vmatpush2.msra.mxu0 0.0
    %1631 = vmatprep.subr.mxu0 0.0
    %1632 = vmatpush2.msra.mxu0 0.0
    %1633 = vmatprep.subr.mxu0 0.0
    %1634 = vmatpush2.msra.mxu0 0.0
    %1635 = vmatprep.subr.mxu0 0.0
    %1636 = vmatpush2.msra.mxu0 0.0
    %1637 = vmatprep.subr.mxu0 0.0
    %1638 = vmatpush2.msra.mxu0 0.0
    %1639 = vmatprep.subr.mxu0 0.0
    %1640 = vmatpush2.msra.mxu0 0.0
    %1641 = vmatprep.subr.mxu0 0.0
    %1642 = vmatpush2.msra.mxu0 0.0
    %1643 = vmatprep.mubr.f32.mxu0 0.0
    %1644 = vmatmul.mubr.f32.gmra.mxu0 %v1577
    %v1645 = vpop.f32.mrf.mxu0
    %v1646 = vadd.f32 0.0, %v1645
    %v1647 = vpop.f32.mrf.mxu0
    %1648 = vdwg.mxu0
    %v1649 = vmul.f32 %v1646, 0.2
    %v1650 = vadd.f32 %v1501, %v1649
    %v1652 = vsel %vm64, %v1646, 0
    %1654 = vmatprep.subr.mxu0 0.0
    %1655 = vmatpush1.msra.mxu0 0.0
    %1656 = vmatprep.subr.mxu0 0.0
    %1657 = vmatpush1.msra.mxu0 0.0
    %1658 = vmatprep.subr.mxu0 0.0
    %1659 = vmatpush1.msra.mxu0 0.0
    %1660 = vmatprep.subr.mxu0 0.0
    %1661 = vmatpush1.msra.mxu0 0.0
    %1662 = vmatprep.subr.mxu0 0.0
    %1663 = vmatpush1.msra.mxu0 0.0
    %1664 = vmatprep.subr.mxu0 0.0
    %1665 = vmatpush1.msra.mxu0 0.0
    %1666 = vmatprep.subr.mxu0 0.0
    %1667 = vmatpush1.msra.mxu0 0.0
    %1668 = vmatprep.subr.mxu0 0.0
    %1669 = vmatpush1.msra.mxu0 0.0
    %1670 = vmatprep.subr.mxu0 0.0
    %1671 = vmatpush1.msra.mxu0 0.0
    %1672 = vmatprep.subr.mxu0 0.0
    %1673 = vmatpush1.msra.mxu0 0.0
    %1674 = vmatprep.subr.mxu0 0.0
    %1675 = vmatpush1.msra.mxu0 0.0
    %1676 = vmatprep.subr.mxu0 0.0
    %1677 = vmatpush1.msra.mxu0 0.0
    %1678 = vmatprep.subr.mxu0 0.0
    %1679 = vmatpush1.msra.mxu0 0.0
    %1680 = vmatprep.subr.mxu0 0.0
    %1681 = vmatpush1.msra.mxu0 0.0
    %1682 = vmatprep.subr.mxu0 0.0
    %1683 = vmatpush1.msra.mxu0 %v45
    %1684 = vmatprep.subr.mxu0 0.0
    %1685 = vmatpush1.msra.mxu0 %v44
    %1686 = vmatprep.subr.mxu0 0.0
    %1687 = vmatpush2.msra.mxu0 0.0
    %1688 = vmatprep.subr.mxu0 0.0
    %1689 = vmatpush2.msra.mxu0 0.0
    %1690 = vmatprep.subr.mxu0 0.0
    %1691 = vmatpush2.msra.mxu0 0.0
    %1692 = vmatprep.subr.mxu0 0.0
    %1693 = vmatpush2.msra.mxu0 0.0
    %1694 = vmatprep.subr.mxu0 0.0
    %1695 = vmatpush2.msra.mxu0 0.0
    %1696 = vmatprep.subr.mxu0 0.0
    %1697 = vmatpush2.msra.mxu0 0.0
    %1698 = vmatprep.subr.mxu0 0.0
    %1699 = vmatpush2.msra.mxu0 0.0
    %1700 = vmatprep.subr.mxu0 0.0
    %1701 = vmatpush2.msra.mxu0 0.0
    %1702 = vmatprep.subr.mxu0 0.0
    %1703 = vmatpush2.msra.mxu0 0.0
    %1704 = vmatprep.subr.mxu0 0.0
    %1705 = vmatpush2.msra.mxu0 0.0
    %1706 = vmatprep.subr.mxu0 0.0
    %1707 = vmatpush2.msra.mxu0 0.0
    %1708 = vmatprep.subr.mxu0 0.0
    %1709 = vmatpush2.msra.mxu0 0.0
    %1710 = vmatprep.subr.mxu0 0.0
    %1711 = vmatpush2.msra.mxu0 0.0
    %1712 = vmatprep.subr.mxu0 0.0
    %1713 = vmatpush2.msra.mxu0 0.0
    %1714 = vmatprep.subr.mxu0 0.0
    %1715 = vmatpush2.msra.mxu0 0.0
    %1716 = vmatprep.subr.mxu0 0.0
    %1717 = vmatpush2.msra.mxu0 0.0
    %1718 = vmatprep.mubr.f32.mxu0 0.0
    %1719 = vmatmul.mubr.f32.gmra.mxu0 %v1652
    %v1720 = vpop.f32.mrf.mxu0
    %v1721 = vadd.f32 0.0, %v1720
    %v1722 = vpop.f32.mrf.mxu0
    %1723 = vdwg.mxu0
    %v1724 = vmul.f32 %v1721, %v906
    %v1726 = vsel %vm139, %v1724, 0
    %1728 = vmatprep.subr.mxu0 0.0
    %1729 = vmatpush1.msra.mxu0 0.0
    %1730 = vmatprep.subr.mxu0 0.0
    %1731 = vmatpush1.msra.mxu0 0.0
    %1732 = vmatprep.subr.mxu0 0.0
    %1733 = vmatpush1.msra.mxu0 0.0
    %1734 = vmatprep.subr.mxu0 0.0
    %1735 = vmatpush1.msra.mxu0 0.0
    %1736 = vmatprep.subr.mxu0 0.0
    %1737 = vmatpush1.msra.mxu0 0.0
    %1738 = vmatprep.subr.mxu0 0.0
    %1739 = vmatpush1.msra.mxu0 0.0
    %1740 = vmatprep.subr.mxu0 0.0
    %1741 = vmatpush1.msra.mxu0 0.0
    %1742 = vmatprep.subr.mxu0 0.0
    %1743 = vmatpush1.msra.mxu0 0.0
    %1744 = vmatprep.subr.mxu0 0.0
    %1745 = vmatpush1.msra.mxu0 0.0
    %1746 = vmatprep.subr.mxu0 0.0
    %1747 = vmatpush1.msra.mxu0 0.0
    %1748 = vmatprep.subr.mxu0 0.0
    %1749 = vmatpush1.msra.mxu0 0.0
    %1750 = vmatprep.subr.mxu0 0.0
    %1751 = vmatpush1.msra.mxu0 0.0
    %1752 = vmatprep.subr.mxu0 0.0
    %1753 = vmatpush1.msra.mxu0 %v43
    %1754 = vmatprep.subr.mxu0 0.0
    %1755 = vmatpush1.msra.mxu0 %v42
    %1756 = vmatprep.subr.mxu0 0.0
    %1757 = vmatpush1.msra.mxu0 %v41
    %1758 = vmatprep.subr.mxu0 0.0
    %1759 = vmatpush1.msra.mxu0 %v40
    %1760 = vmatprep.subr.mxu0 0.0
    %1761 = vmatpush2.msra.mxu0 0.0
    %1762 = vmatprep.subr.mxu0 0.0
    %1763 = vmatpush2.msra.mxu0 0.0
    %1764 = vmatprep.subr.mxu0 0.0
    %1765 = vmatpush2.msra.mxu0 0.0
    %1766 = vmatprep.subr.mxu0 0.0
    %1767 = vmatpush2.msra.mxu0 0.0
    %1768 = vmatprep.subr.mxu0 0.0
    %1769 = vmatpush2.msra.mxu0 0.0
    %1770 = vmatprep.subr.mxu0 0.0
    %1771 = vmatpush2.msra.mxu0 0.0
    %1772 = vmatprep.subr.mxu0 0.0
    %1773 = vmatpush2.msra.mxu0 0.0
    %1774 = vmatprep.subr.mxu0 0.0
    %1775 = vmatpush2.msra.mxu0 0.0
    %1776 = vmatprep.subr.mxu0 0.0
    %1777 = vmatpush2.msra.mxu0 0.0
    %1778 = vmatprep.subr.mxu0 0.0
    %1779 = vmatpush2.msra.mxu0 0.0
    %1780 = vmatprep.subr.mxu0 0.0
    %1781 = vmatpush2.msra.mxu0 0.0
    %1782 = vmatprep.subr.mxu0 0.0
    %1783 = vmatpush2.msra.mxu0 0.0
    %1784 = vmatprep.subr.mxu0 0.0
    %1785 = vmatpush2.msra.mxu0 0.0
    %1786 = vmatprep.subr.mxu0 0.0
    %1787 = vmatpush2.msra.mxu0 0.0
    %1788 = vmatprep.subr.mxu0 0.0
    %1789 = vmatpush2.msra.mxu0 0.0
    %1790 = vmatprep.subr.mxu0 0.0
    %1791 = vmatpush2.msra.mxu0 0.0
    %1792 = vmatprep.mubr.f32.mxu0 0.0
    %1793 = vmatmul.mubr.f32.gmra.mxu0 %v1726
    %v1794 = vpop.f32.mrf.mxu0
    %v1795 = vadd.f32 0.0, %v1794
    %v1796 = vpop.f32.mrf.mxu0
    %1797 = vdwg.mxu0
    %v1798 = vmul.f32 %v1795, -0.16666667
    %v1799 = vadd.f32 %v1650, %v1798
    %v1801 = vsel %vm64, %v1795, 0
    %1803 = vmatprep.subr.mxu0 0.0
    %1804 = vmatpush1.msra.mxu0 0.0
    %1805 = vmatprep.subr.mxu0 0.0
    %1806 = vmatpush1.msra.mxu0 0.0
    %1807 = vmatprep.subr.mxu0 0.0
    %1808 = vmatpush1.msra.mxu0 0.0
    %1809 = vmatprep.subr.mxu0 0.0
    %1810 = vmatpush1.msra.mxu0 0.0
    %1811 = vmatprep.subr.mxu0 0.0
    %1812 = vmatpush1.msra.mxu0 0.0
    %1813 = vmatprep.subr.mxu0 0.0
    %1814 = vmatpush1.msra.mxu0 0.0
    %1815 = vmatprep.subr.mxu0 0.0
    %1816 = vmatpush1.msra.mxu0 0.0
    %1817 = vmatprep.subr.mxu0 0.0
    %1818 = vmatpush1.msra.mxu0 0.0
    %1819 = vmatprep.subr.mxu0 0.0
    %1820 = vmatpush1.msra.mxu0 0.0
    %1821 = vmatprep.subr.mxu0 0.0
    %1822 = vmatpush1.msra.mxu0 0.0
    %1823 = vmatprep.subr.mxu0 0.0
    %1824 = vmatpush1.msra.mxu0 0.0
    %1825 = vmatprep.subr.mxu0 0.0
    %1826 = vmatpush1.msra.mxu0 0.0
    %1827 = vmatprep.subr.mxu0 0.0
    %1828 = vmatpush1.msra.mxu0 0.0
    %1829 = vmatprep.subr.mxu0 0.0
    %1830 = vmatpush1.msra.mxu0 0.0
    %1831 = vmatprep.subr.mxu0 0.0
    %1832 = vmatpush1.msra.mxu0 %v45
    %1833 = vmatprep.subr.mxu0 0.0
    %1834 = vmatpush1.msra.mxu0 %v44
    %1835 = vmatprep.subr.mxu0 0.0
    %1836 = vmatpush2.msra.mxu0 0.0
    %1837 = vmatprep.subr.mxu0 0.0
    %1838 = vmatpush2.msra.mxu0 0.0
    %1839 = vmatprep.subr.mxu0 0.0
    %1840 = vmatpush2.msra.mxu0 0.0
    %1841 = vmatprep.subr.mxu0 0.0
    %1842 = vmatpush2.msra.mxu0 0.0
    %1843 = vmatprep.subr.mxu0 0.0
    %1844 = vmatpush2.msra.mxu0 0.0
    %1845 = vmatprep.subr.mxu0 0.0
    %1846 = vmatpush2.msra.mxu0 0.0
    %1847 = vmatprep.subr.mxu0 0.0
    %1848 = vmatpush2.msra.mxu0 0.0
    %1849 = vmatprep.subr.mxu0 0.0
    %1850 = vmatpush2.msra.mxu0 0.0
    %1851 = vmatprep.subr.mxu0 0.0
    %1852 = vmatpush2.msra.mxu0 0.0
    %1853 = vmatprep.subr.mxu0 0.0
    %1854 = vmatpush2.msra.mxu0 0.0
    %1855 = vmatprep.subr.mxu0 0.0
    %1856 = vmatpush2.msra.mxu0 0.0
    %1857 = vmatprep.subr.mxu0 0.0
    %1858 = vmatpush2.msra.mxu0 0.0
    %1859 = vmatprep.subr.mxu0 0.0
    %1860 = vmatpush2.msra.mxu0 0.0
    %1861 = vmatprep.subr.mxu0 0.0
    %1862 = vmatpush2.msra.mxu0 0.0
    %1863 = vmatprep.subr.mxu0 0.0
    %1864 = vmatpush2.msra.mxu0 0.0
    %1865 = vmatprep.subr.mxu0 0.0
    %1866 = vmatpush2.msra.mxu0 0.0
    %1867 = vmatprep.mubr.f32.mxu0 0.0
    %1868 = vmatmul.mubr.f32.gmra.mxu0 %v1801
    %v1869 = vpop.f32.mrf.mxu0
    %v1870 = vadd.f32 0.0, %v1869
    %v1871 = vpop.f32.mrf.mxu0
    %1872 = vdwg.mxu0
    %v1873 = vmul.f32 %v1870, %v906
    %v1875 = vsel %vm139, %v1873, 0
    %1877 = vmatprep.subr.mxu0 0.0
    %1878 = vmatpush1.msra.mxu0 0.0
    %1879 = vmatprep.subr.mxu0 0.0
    %1880 = vmatpush1.msra.mxu0 0.0
    %1881 = vmatprep.subr.mxu0 0.0
    %1882 = vmatpush1.msra.mxu0 0.0
    %1883 = vmatprep.subr.mxu0 0.0
    %1884 = vmatpush1.msra.mxu0 0.0
    %1885 = vmatprep.subr.mxu0 0.0
    %1886 = vmatpush1.msra.mxu0 0.0
    %1887 = vmatprep.subr.mxu0 0.0
    %1888 = vmatpush1.msra.mxu0 0.0
    %1889 = vmatprep.subr.mxu0 0.0
    %1890 = vmatpush1.msra.mxu0 0.0
    %1891 = vmatprep.subr.mxu0 0.0
    %1892 = vmatpush1.msra.mxu0 0.0
    %1893 = vmatprep.subr.mxu0 0.0
    %1894 = vmatpush1.msra.mxu0 0.0
    %1895 = vmatprep.subr.mxu0 0.0
    %1896 = vmatpush1.msra.mxu0 0.0
    %1897 = vmatprep.subr.mxu0 0.0
    %1898 = vmatpush1.msra.mxu0 0.0
    %1899 = vmatprep.subr.mxu0 0.0
    %1900 = vmatpush1.msra.mxu0 0.0
    %1901 = vmatprep.subr.mxu0 0.0
    %1902 = vmatpush1.msra.mxu0 %v43
    %1903 = vmatprep.subr.mxu0 0.0
    %1904 = vmatpush1.msra.mxu0 %v42
    %1905 = vmatprep.subr.mxu0 0.0
    %1906 = vmatpush1.msra.mxu0 %v41
    %1907 = vmatprep.subr.mxu0 0.0
    %1908 = vmatpush1.msra.mxu0 %v40
    %1909 = vmatprep.subr.mxu0 0.0
    %1910 = vmatpush2.msra.mxu0 0.0
    %1911 = vmatprep.subr.mxu0 0.0
    %1912 = vmatpush2.msra.mxu0 0.0
    %1913 = vmatprep.subr.mxu0 0.0
    %1914 = vmatpush2.msra.mxu0 0.0
    %1915 = vmatprep.subr.mxu0 0.0
    %1916 = vmatpush2.msra.mxu0 0.0
    %1917 = vmatprep.subr.mxu0 0.0
    %1918 = vmatpush2.msra.mxu0 0.0
    %1919 = vmatprep.subr.mxu0 0.0
    %1920 = vmatpush2.msra.mxu0 0.0
    %1921 = vmatprep.subr.mxu0 0.0
    %1922 = vmatpush2.msra.mxu0 0.0
    %1923 = vmatprep.subr.mxu0 0.0
    %1924 = vmatpush2.msra.mxu0 0.0
    %1925 = vmatprep.subr.mxu0 0.0
    %1926 = vmatpush2.msra.mxu0 0.0
    %1927 = vmatprep.subr.mxu0 0.0
    %1928 = vmatpush2.msra.mxu0 0.0
    %1929 = vmatprep.subr.mxu0 0.0
    %1930 = vmatpush2.msra.mxu0 0.0
    %1931 = vmatprep.subr.mxu0 0.0
    %1932 = vmatpush2.msra.mxu0 0.0
    %1933 = vmatprep.subr.mxu0 0.0
    %1934 = vmatpush2.msra.mxu0 0.0
    %1935 = vmatprep.subr.mxu0 0.0
    %1936 = vmatpush2.msra.mxu0 0.0
    %1937 = vmatprep.subr.mxu0 0.0
    %1938 = vmatpush2.msra.mxu0 0.0
    %1939 = vmatprep.subr.mxu0 0.0
    %1940 = vmatpush2.msra.mxu0 0.0
    %1941 = vmatprep.mubr.f32.mxu0 0.0
    %1942 = vmatmul.mubr.f32.gmra.mxu0 %v1875
    %v1943 = vpop.f32.mrf.mxu0
    %v1944 = vadd.f32 0.0, %v1943
    %v1945 = vpop.f32.mrf.mxu0
    %1946 = vdwg.mxu0
    %v1947 = vmul.f32 %v1944, 0.14285715
    %v1948 = vadd.f32 %v1799, %v1947
    %v1950 = vsel %vm64, %v1944, 0
    %1952 = vmatprep.subr.mxu0 0.0
    %1953 = vmatpush1.msra.mxu0 0.0
    %1954 = vmatprep.subr.mxu0 0.0
    %1955 = vmatpush1.msra.mxu0 0.0
    %1956 = vmatprep.subr.mxu0 0.0
    %1957 = vmatpush1.msra.mxu0 0.0
    %1958 = vmatprep.subr.mxu0 0.0
    %1959 = vmatpush1.msra.mxu0 0.0
    %1960 = vmatprep.subr.mxu0 0.0
    %1961 = vmatpush1.msra.mxu0 0.0
    %1962 = vmatprep.subr.mxu0 0.0
    %1963 = vmatpush1.msra.mxu0 0.0
    %1964 = vmatprep.subr.mxu0 0.0
    %1965 = vmatpush1.msra.mxu0 0.0
    %1966 = vmatprep.subr.mxu0 0.0
    %1967 = vmatpush1.msra.mxu0 0.0
    %1968 = vmatprep.subr.mxu0 0.0
    %1969 = vmatpush1.msra.mxu0 0.0
    %1970 = vmatprep.subr.mxu0 0.0
    %1971 = vmatpush1.msra.mxu0 0.0
    %1972 = vmatprep.subr.mxu0 0.0
    %1973 = vmatpush1.msra.mxu0 0.0
    %1974 = vmatprep.subr.mxu0 0.0
    %1975 = vmatpush1.msra.mxu0 0.0
    %1976 = vmatprep.subr.mxu0 0.0
    %1977 = vmatpush1.msra.mxu0 0.0
    %1978 = vmatprep.subr.mxu0 0.0
    %1979 = vmatpush1.msra.mxu0 0.0
    %1980 = vmatprep.subr.mxu0 0.0
    %1981 = vmatpush1.msra.mxu0 %v45
    %1982 = vmatprep.subr.mxu0 0.0
    %1983 = vmatpush1.msra.mxu0 %v44
    %1984 = vmatprep.subr.mxu0 0.0
    %1985 = vmatpush2.msra.mxu0 0.0
    %1986 = vmatprep.subr.mxu0 0.0
    %1987 = vmatpush2.msra.mxu0 0.0
    %1988 = vmatprep.subr.mxu0 0.0
    %1989 = vmatpush2.msra.mxu0 0.0
    %1990 = vmatprep.subr.mxu0 0.0
    %1991 = vmatpush2.msra.mxu0 0.0
    %1992 = vmatprep.subr.mxu0 0.0
    %1993 = vmatpush2.msra.mxu0 0.0
    %1994 = vmatprep.subr.mxu0 0.0
    %1995 = vmatpush2.msra.mxu0 0.0
    %1996 = vmatprep.subr.mxu0 0.0
    %1997 = vmatpush2.msra.mxu0 0.0
    %1998 = vmatprep.subr.mxu0 0.0
    %1999 = vmatpush2.msra.mxu0 0.0
    %2000 = vmatprep.subr.mxu0 0.0
    %2001 = vmatpush2.msra.mxu0 0.0
    %2002 = vmatprep.subr.mxu0 0.0
    %2003 = vmatpush2.msra.mxu0 0.0
    %2004 = vmatprep.subr.mxu0 0.0
    %2005 = vmatpush2.msra.mxu0 0.0
    %2006 = vmatprep.subr.mxu0 0.0
    %2007 = vmatpush2.msra.mxu0 0.0
    %2008 = vmatprep.subr.mxu0 0.0
    %2009 = vmatpush2.msra.mxu0 0.0
    %2010 = vmatprep.subr.mxu0 0.0
    %2011 = vmatpush2.msra.mxu0 0.0
    %2012 = vmatprep.subr.mxu0 0.0
    %2013 = vmatpush2.msra.mxu0 0.0
    %2014 = vmatprep.subr.mxu0 0.0
    %2015 = vmatpush2.msra.mxu0 0.0
    %2016 = vmatprep.mubr.f32.mxu0 0.0
    %2017 = vmatmul.mubr.f32.gmra.mxu0 %v1950
    %v2018 = vpop.f32.mrf.mxu0
    %v2019 = vadd.f32 0.0, %v2018
    %v2020 = vpop.f32.mrf.mxu0
    %2021 = vdwg.mxu0
    %v2022 = vmul.f32 %v2019, %v906
    %v2024 = vsel %vm139, %v2022, 0
    %2026 = vmatprep.subr.mxu0 0.0
    %2027 = vmatpush1.msra.mxu0 0.0
    %2028 = vmatprep.subr.mxu0 0.0
    %2029 = vmatpush1.msra.mxu0 0.0
    %2030 = vmatprep.subr.mxu0 0.0
    %2031 = vmatpush1.msra.mxu0 0.0
    %2032 = vmatprep.subr.mxu0 0.0
    %2033 = vmatpush1.msra.mxu0 0.0
    %2034 = vmatprep.subr.mxu0 0.0
    %2035 = vmatpush1.msra.mxu0 0.0
    %2036 = vmatprep.subr.mxu0 0.0
    %2037 = vmatpush1.msra.mxu0 0.0
    %2038 = vmatprep.subr.mxu0 0.0
    %2039 = vmatpush1.msra.mxu0 0.0
    %2040 = vmatprep.subr.mxu0 0.0
    %2041 = vmatpush1.msra.mxu0 0.0
    %2042 = vmatprep.subr.mxu0 0.0
    %2043 = vmatpush1.msra.mxu0 0.0
    %2044 = vmatprep.subr.mxu0 0.0
    %2045 = vmatpush1.msra.mxu0 0.0
    %2046 = vmatprep.subr.mxu0 0.0
    %2047 = vmatpush1.msra.mxu0 0.0
    %2048 = vmatprep.subr.mxu0 0.0
    %2049 = vmatpush1.msra.mxu0 0.0
    %2050 = vmatprep.subr.mxu0 0.0
    %2051 = vmatpush1.msra.mxu0 %v43
    %2052 = vmatprep.subr.mxu0 0.0
    %2053 = vmatpush1.msra.mxu0 %v42
    %2054 = vmatprep.subr.mxu0 0.0
    %2055 = vmatpush1.msra.mxu0 %v41
    %2056 = vmatprep.subr.mxu0 0.0
    %2057 = vmatpush1.msra.mxu0 %v40
    %2058 = vmatprep.subr.mxu0 0.0
    %2059 = vmatpush2.msra.mxu0 0.0
    %2060 = vmatprep.subr.mxu0 0.0
    %2061 = vmatpush2.msra.mxu0 0.0
    %2062 = vmatprep.subr.mxu0 0.0
    %2063 = vmatpush2.msra.mxu0 0.0
    %2064 = vmatprep.subr.mxu0 0.0
    %2065 = vmatpush2.msra.mxu0 0.0
    %2066 = vmatprep.subr.mxu0 0.0
    %2067 = vmatpush2.msra.mxu0 0.0
    %2068 = vmatprep.subr.mxu0 0.0
    %2069 = vmatpush2.msra.mxu0 0.0
    %2070 = vmatprep.subr.mxu0 0.0
    %2071 = vmatpush2.msra.mxu0 0.0
    %2072 = vmatprep.subr.mxu0 0.0
    %2073 = vmatpush2.msra.mxu0 0.0
    %2074 = vmatprep.subr.mxu0 0.0
    %2075 = vmatpush2.msra.mxu0 0.0
    %2076 = vmatprep.subr.mxu0 0.0
    %2077 = vmatpush2.msra.mxu0 0.0
    %2078 = vmatprep.subr.mxu0 0.0
    %2079 = vmatpush2.msra.mxu0 0.0
    %2080 = vmatprep.subr.mxu0 0.0
    %2081 = vmatpush2.msra.mxu0 0.0
    %2082 = vmatprep.subr.mxu0 0.0
    %2083 = vmatpush2.msra.mxu0 0.0
    %2084 = vmatprep.subr.mxu0 0.0
    %2085 = vmatpush2.msra.mxu0 0.0
    %2086 = vmatprep.subr.mxu0 0.0
    %2087 = vmatpush2.msra.mxu0 0.0
    %2088 = vmatprep.subr.mxu0 0.0
    %2089 = vmatpush2.msra.mxu0 0.0
    %2090 = vmatprep.mubr.f32.mxu0 0.0
    %2091 = vmatmul.mubr.f32.gmra.mxu0 %v2024
    %v2092 = vpop.f32.mrf.mxu0
    %v2093 = vadd.f32 0.0, %v2092
    %v2094 = vpop.f32.mrf.mxu0
    %2095 = vdwg.mxu0
    %v2096 = vmul.f32 %v2093, -0.125
    %v2097 = vadd.f32 %v1948, %v2096
    %2098 = vst.msk [vmem:[#allocation2] sm:$0xff] %vm64, %v215
    %v2099 = vmul.f32 %v2097, %v33
    %v2100 = vsel %vm64, %v2099, 0.0
    %2101 = vadd.xlane.f32.xlu0 %v2100
    %v2102 = vpop.xlane.xlu0 %2101
    %vm2103 = vcmask 7168
    %2104 = vst.msk [vmem:[%s9] sm:$0xff] %vm2103, %v2102
    // Predicated region
    $region41: #{residual_forward.1} parent=1 // pred_check
      _
    $region42: #{residual_forward.1} parent=1 // pred_check_branch
      %2106 = sbr.rel (0) target = $region44
    $region43: #{residual_forward.1} parent=1 // pred_region
      %s2108 = ssub.s32 128, 128
      %2109 = vsyncadd [#allocation3], %s2108
      %s2111 = sshll.u32 [#allocation2], 4
      %s2112 = int_to_ptr.vmem [resolvable:$true] %s2111
      %2114 = dma.vmem_to_hbm [thread:$0]  %s2112, 128, %s8, [#allocation3]
    $region44: #{residual_forward.1} parent=1 // pred_fallthru
      _
    // Predicated region
    $region45: #{residual_forward.1} parent=1 // pred_check
      _
    $region46: #{residual_forward.1} parent=1 // pred_check_branch
      %2116 = sbr.rel (0) target = $region48
    $region47: #{residual_forward.1} parent=1 // pred_region
      _
    $region48: #{residual_forward.1} parent=1 // pred_fallthru
      _
    // Predicated region
    $region49: #{residual_forward.1} parent=1 // pred_check
      _
    $region50: #{residual_forward.1} parent=1 // pred_check_branch
      %2118 = sbr.rel (0) target = $region52
    $region51: #{residual_forward.1} parent=1 // pred_region
      %2119 = dma.done [#allocation3], 128
    $region52: #{residual_forward.1} parent=1 // pred_fallthru
      _
    // Predicated region
    $region53: #{residual_forward.1} parent=1 // pred_check
      _
    $region54: #{residual_forward.1} parent=1 // pred_check_branch
      %2121 = sbr.rel (0) target = $region56
    $region55: #{residual_forward.1} parent=1 // pred_region
      _
    $region56: #{residual_forward.1} parent=1 // pred_fallthru
      _
    %2122 = vsyncpa [#allocation3], 1

</llo_original>
